<compile_context>
chip_gen: v7x
topology: tpu7x:2x2x1
jax: 0.10.0
libtpu: 0.0.40
codegen_flags: <defaults>
</compile_context>

<pallas_src>
import functools

import jax
import jax.numpy as jnp
from jax import lax
from jax.experimental import pallas as pl
from jax.experimental.pallas import tpu as pltpu

MARGIN = 5.0
_BIG = 1e30       # min identity / "never wins a max" sentinel
_LANE = 128


def _round_up(x: int, m: int) -> int:
    return ((x + m - 1) // m) * m


def _vmem_budget_bytes() -> int:
    try:
        phys = int(pltpu.get_tpu_info().vmem_capacity_bytes)
    except Exception:
        phys = 64 * 1024 * 1024
    return min((phys * 3) // 4, 100 * 1024 * 1024)


def _zero_safe_sqrt(x):
    # reference semantics: d == 0 -> 0, else sqrt(d) (eps keeps sqrt defined)
    zm = (x == 0.0).astype(jnp.float32)
    return (1.0 - zm) * jnp.sqrt(x + zm * 1e-16)


def _triplet_kernel(emb_r_ref, embt_ref, lab_c_ref, lab_r_ref,
                    sq_c_ref, sq_r_ref, *rest,
                    tm, tn, n_real, has_pad, margin):
    if has_pad:
        negbias_ref, tl_ref, hp_acc, mn_acc, rm_acc = rest
    else:
        tl_ref, hp_acc, mn_acc, rm_acc = rest
        negbias_ref = None

    i = pl.program_id(0)      # anchor (row) tile
    j = pl.program_id(1)      # candidate (col) tile -- reduction axis

    @pl.when(j == 0)
    def _init():
        hp_acc[...] = jnp.full(hp_acc.shape, -_BIG, jnp.float32)
        mn_acc[...] = jnp.full(mn_acc.shape, _BIG, jnp.float32)
        rm_acc[...] = jnp.full(rm_acc.shape, -_BIG, jnp.float32)

    # MXU: canonical (TM, K) x (K, TN) contraction, f32 accumulation.
    dot = jnp.dot(emb_r_ref[...], embt_ref[...],
                  preferred_element_type=jnp.float32)            # (TM, TN)

    # shifted squared distance s[a,c] = ||e_c||^2 - 2 e_a.e_c ; the anchor
    # norm and the >=0 clamp are deferred to finalize (they commute with the
    # per-row max/min).
    s = sq_r_ref[...] - 2.0 * dot

    labels_equal = lab_c_ref[...] == lab_r_ref[...]              # (TM, TN)

    # self mask from a loop-invariant iota difference vs. a single scalar.
    diff = (lax.broadcasted_iota(jnp.int32, (tm, tn), 0)
            - lax.broadcasted_iota(jnp.int32, (tm, tn), 1))
    eye = diff == (j * tn - i * tm)

    # hardest positive (same label, not self). Padded candidate columns carry
    # sq = -_BIG, so they can never win this max (no pad mask needed).
    pos = jnp.where(labels_equal & (~eye), s, -_BIG)
    hp_acc[...] = jnp.maximum(hp_acc[...], jnp.max(pos, axis=1, keepdims=True))

    # min over different-label candidates; padded columns are pushed out of
    # the min by a +4*_BIG additive bias (only materialized when Bp != B).
    neg = jnp.where(labels_equal, _BIG, s)
    if has_pad:
        neg = neg + negbias_ref[...]
    mn_acc[...] = jnp.minimum(mn_acc[...], jnp.min(neg, axis=1, keepdims=True))

    # row max over all candidates (the reference includes the diagonal too);
    # padded columns (-_BIG) never win, so no mask is needed.
    rm_acc[...] = jnp.maximum(rm_acc[...], jnp.max(s, axis=1, keepdims=True))

    @pl.when(j == pl.num_programs(1) - 1)
    def _finalize():
        sq_i = sq_c_ref[...]                                      # (TM, 1)
        hp_sq = jnp.maximum(hp_acc[...] + sq_i, 0.0)
        # min(min_over_negatives, row_max) reproduces the reference's
        # "no negatives -> row max" inflation fallback exactly.
        hn_sq = jnp.maximum(jnp.minimum(mn_acc[...], rm_acc[...]) + sq_i, 0.0)
        tl = jnp.maximum(_zero_safe_sqrt(hp_sq) - _zero_safe_sqrt(hn_sq)
                         + margin, 0.0)
        if has_pad:
            rvalid = (i * tm
                      + lax.broadcasted_iota(jnp.int32, (tm, 1), 0)) < n_real
            tl = jnp.where(rvalid, tl, 0.0)
        tl_ref[...] = tl


def _pick_tiles(B, Dp, itemsize, budget):
    Bp = _round_up(max(B, _LANE), _LANE)
    # Anchor tile: as large as VMEM allows, but keep >= 2 anchor tiles when
    # the batch has >= 2 lane tiles (v7x megacore) and keep TM | Bp.
    tm = _LANE
    for t in (4 * _LANE, 2 * _LANE):
        if Bp % t == 0 and Bp // t >= 2 and 2 * t * Dp * itemsize <= budget // 4:
            tm = t
            break
    # Candidate tiling: full residency if it (plus the (TM, Bp) f32 working
    # set) fits comfortably, otherwise stream TM-wide column tiles.
    cand_bytes = Bp * Dp * itemsize
    resident = (cand_bytes <= budget // 3) and (6 * tm * Bp * 4 <= budget // 3)
    if resident:
        tn = Bp
    else:
        tn = tm
        while tn > _LANE and (2 * Dp * tn * itemsize + 6 * tm * tn * 4) > budget // 2:
            tn //= 2
    return tm, tn, Bp


@functools.partial(jax.jit, static_argnames=("margin", "tile_override"))
def batch_hard_triplet_loss(embeddings: jax.Array, labels: jax.Array,
                            margin: float = MARGIN,
                            tile_override=None) -> jax.Array:
    """embeddings: (B, D) float, labels: (B,) int. Returns scalar f32 loss."""
    B, D = embeddings.shape
    itemsize = jnp.dtype(embeddings.dtype).itemsize
    Dp = _round_up(max(D, _LANE), _LANE)
    budget = _vmem_budget_bytes()

    if tile_override is not None:
        tm, tn = tile_override
        Bp = _round_up(_round_up(max(B, _LANE), _LANE), max(tm, tn))
    else:
        tm, tn, Bp = _pick_tiles(B, Dp, itemsize, budget)

    has_pad = Bp != B
    n_i, n_j = Bp // tm, Bp // tn

    emb_p = jnp.pad(embeddings, ((0, Bp - B), (0, Dp - D)))
    emb_t = emb_p.T                      # contiguous (Dp, Bp) MXU feed
    lab_p = jnp.pad(labels.astype(jnp.int32), (0, Bp - B))
    sq = jnp.sum(jnp.square(emb_p.astype(jnp.float32)), axis=1)   # ||e||^2
    if has_pad:
        valid = jnp.arange(Bp) < B
        # pad columns: sq = -_BIG -> never win hardest-pos / row-max searches
        sq = jnp.where(valid, sq, -_BIG)
        neg_bias = jnp.where(valid, 0.0, 4.0 * _BIG).astype(jnp.float32)

    ins = [emb_p, emb_t, lab_p.reshape(Bp, 1), lab_p.reshape(1, Bp),
           sq.reshape(Bp, 1), sq.reshape(1, Bp)]
    in_specs = [
        pl.BlockSpec((tm, Dp), lambda i, j: (i, 0)),   # anchor rows
        pl.BlockSpec((Dp, tn), lambda i, j: (0, j)),   # candidate cols (pre-T)
        pl.BlockSpec((tm, 1), lambda i, j: (i, 0)),    # anchor labels
        pl.BlockSpec((1, tn), lambda i, j: (0, j)),    # candidate labels
        pl.BlockSpec((tm, 1), lambda i, j: (i, 0)),    # anchor ||e||^2
        pl.BlockSpec((1, tn), lambda i, j: (0, j)),    # candidate ||e||^2
    ]
    if has_pad:
        ins.append(neg_bias.reshape(1, Bp))
        in_specs.append(pl.BlockSpec((1, tn), lambda i, j: (0, j)))

    kernel = functools.partial(_triplet_kernel, tm=tm, tn=tn, n_real=B,
                               has_pad=has_pad, margin=float(margin))

    cand_reads = 1 if n_j == 1 else n_i   # resident candidate block: one DMA
    bytes_accessed = (1 + cand_reads) * Bp * Dp * itemsize + 6 * Bp * 4

    tl = pl.pallas_call(
        kernel,
        out_shape=jax.ShapeDtypeStruct((Bp, 1), jnp.float32),
        grid=(n_i, n_j),
        in_specs=in_specs,
        out_specs=pl.BlockSpec((tm, 1), lambda i, j: (i, 0)),
        scratch_shapes=[pltpu.VMEM((tm, 1), jnp.float32),   # hardest-pos acc
                        pltpu.VMEM((tm, 1), jnp.float32),   # min-negative acc
                        pltpu.VMEM((tm, 1), jnp.float32)],  # row-max acc
        compiler_params=pltpu.CompilerParams(
            dimension_semantics=("parallel", "arbitrary"),
            vmem_limit_bytes=int(budget)),
        cost_estimate=pl.CostEstimate(
            flops=2 * Bp * Bp * Dp,
            transcendentals=2 * Bp,
            bytes_accessed=int(bytes_accessed)),
    )(*ins)

    # pad rows were zeroed in-kernel; mean over the real batch only.
    return jnp.sum(tl) / jnp.float32(B)


def _reference(embeddings, labels, margin=MARGIN):
    # pure-JAX transcription of the PyTorch forward, for sanity checking
    emb = embeddings.astype(jnp.float32)
    B = emb.shape[0]
    dot = emb @ emb.T
    sq = jnp.diag(dot)
    d = sq[None, :] - 2.0 * dot + sq[:, None]
    d = jnp.maximum(d, 0.0)
    m = (d == 0.0).astype(jnp.float32)
    d = (1.0 - m) * jnp.sqrt(d + m * 1e-16)
    eye = jnp.eye(B, dtype=bool)
    eq = labels[None, :] == labels[:, None]
    mp = (eq & ~eye).astype(jnp.float32)
    hp = jnp.max(mp * d, axis=1, keepdims=True)
    mn = (~eq).astype(jnp.float32)
    man = jnp.max(d, axis=1, keepdims=True)
    hn = jnp.min(d + man * (1.0 - mn), axis=1, keepdims=True)
    tl = jnp.maximum(hp - hn + margin, 0.0)
    return jnp.mean(tl)


if __name__ == "__main__":
    key = jax.random.PRNGKey(0)
    ks = jax.random.split(key, 8)

    cases = [
        # (embeddings, labels, tile_override)
        (jax.random.normal(ks[0], (8, 32), jnp.float32),
         jax.random.randint(ks[1], (8,), 0, 3, dtype=jnp.int32), None),
        (jax.random.normal(ks[2], (16, 48), jnp.float32),
         jax.random.randint(ks[3], (16,), 0, 4, dtype=jnp.int32), None),
        # degenerate single-class batch (exercises the "no negatives" fallback)
        (jax.random.normal(ks[0], (8, 32), jnp.float32),
         jnp.zeros((8,), jnp.int32), None),
        # padded, multi-tile streaming path (grid 3x3, row/col padding active)
        (jax.random.normal(ks[4], (300, 70), jnp.float32),
         jax.random.randint(ks[5], (300,), 0, 5, dtype=jnp.int32), (128, 128)),
        # exact multiple of 128 (no-padding fast path), multi-tile streaming
        (jax.random.normal(ks[6], (256, 128), jnp.float32),
         jax.random.randint(ks[7], (256,), 0, 8, dtype=jnp.int32), (128, 128)),
    ]

    for rep, lab, tiles in cases:
        loss = batch_hard_triplet_loss(rep, lab, tile_override=tiles)
        jax.block_until_ready(loss)
        ref = _reference(rep, lab)
        assert jnp.allclose(loss, ref, atol=1e-4, rtol=1e-4), (loss, ref, rep.shape)

    print("KERNEL_OK")
</pallas_src>

<mosaic_0001>
module attributes {stable_mosaic.version = 11 : i64} {
  func.func @_triplet_kernel(%arg0: i32, %arg1: i32, %arg2: memref<128x128xf32, #tpu.memory_space<vmem>>, %arg3: memref<128x128xf32, #tpu.memory_space<vmem>>, %arg4: memref<128x1xi32, #tpu.memory_space<vmem>>, %arg5: memref<1x128xi32, #tpu.memory_space<vmem>>, %arg6: memref<128x1xf32, #tpu.memory_space<vmem>>, %arg7: memref<1x128xf32, #tpu.memory_space<vmem>>, %arg8: memref<1x128xf32, #tpu.memory_space<vmem>>, %arg9: memref<128x1xf32, #tpu.memory_space<vmem>>, %arg10: memref<128x1xf32, #tpu.memory_space<vmem>>, %arg11: memref<128x1xf32, #tpu.memory_space<vmem>>, %arg12: memref<128x1xf32, #tpu.memory_space<vmem>>) attributes {dimension_semantics = [#tpu.dimension_semantics<parallel>, #tpu.dimension_semantics<arbitrary>], iteration_bounds = array<i64: 1, 1>, scalar_prefetch = 0 : i64, scratch_operands = 3 : i64, tpu.core_type = #tpu.core_type<tc>, window_params = [{transform_indices = @transform_0, window_bounds = array<i64: 128, 128>}, {transform_indices = @transform_1, window_bounds = array<i64: 128, 128>}, {transform_indices = @transform_2, window_bounds = array<i64: 128, 1>}, {transform_indices = @transform_3, window_bounds = array<i64: 1, 128>}, {transform_indices = @transform_4, window_bounds = array<i64: 128, 1>}, {transform_indices = @transform_5, window_bounds = array<i64: 1, 128>}, {transform_indices = @transform_6, window_bounds = array<i64: 1, 128>}, {transform_indices = @transform_7, window_bounds = array<i64: 128, 1>}]} {
    %c0_i32 = arith.constant 0 : i32
    %0 = arith.cmpi eq, %arg1, %c0_i32 : i32
    %1 = arith.extui %0 : i1 to i32
    %c0_i32_0 = arith.constant 0 : i32
    %2 = arith.cmpi ne, %1, %c0_i32_0 : i32
    scf.if %2 {
      %cst_34 = arith.constant -1.000000e+30 : f32
      %51 = vector.broadcast %cst_34 : f32 to vector<128x1xf32>
      %c0_35 = arith.constant 0 : index
      %c0_36 = arith.constant 0 : index
      %52 = vector.load %arg10[%c0_35, %c0_36] : memref<128x1xf32, #tpu.memory_space<vmem>>, vector<128x1xf32>
      tpu.vector_store %arg10[%c0_35, %c0_36], %51 {strides = array<i32>} : memref<128x1xf32, #tpu.memory_space<vmem>>, vector<128x1xf32>,
      %cst_37 = arith.constant 1.000000e+30 : f32
      %53 = vector.broadcast %cst_37 : f32 to vector<128x1xf32>
      %c0_38 = arith.constant 0 : index
      %c0_39 = arith.constant 0 : index
      %54 = vector.load %arg11[%c0_38, %c0_39] : memref<128x1xf32, #tpu.memory_space<vmem>>, vector<128x1xf32>
      tpu.vector_store %arg11[%c0_38, %c0_39], %53 {strides = array<i32>} : memref<128x1xf32, #tpu.memory_space<vmem>>, vector<128x1xf32>,
      %cst_40 = arith.constant -1.000000e+30 : f32
      %55 = vector.broadcast %cst_40 : f32 to vector<128x1xf32>
      %c0_41 = arith.constant 0 : index
      %c0_42 = arith.constant 0 : index
      %56 = vector.load %arg12[%c0_41, %c0_42] : memref<128x1xf32, #tpu.memory_space<vmem>>, vector<128x1xf32>
      tpu.vector_store %arg12[%c0_41, %c0_42], %55 {strides = array<i32>} : memref<128x1xf32, #tpu.memory_space<vmem>>, vector<128x1xf32>,
    } else {
    }
    %c0 = arith.constant 0 : index
    %c0_1 = arith.constant 0 : index
    %3 = vector.load %arg2[%c0, %c0_1] : memref<128x128xf32, #tpu.memory_space<vmem>>, vector<128x128xf32>
    %c0_2 = arith.constant 0 : index
    %c0_3 = arith.constant 0 : index
    %4 = vector.load %arg3[%c0_2, %c0_3] : memref<128x128xf32, #tpu.memory_space<vmem>>, vector<128x128xf32>
    %cst = arith.constant dense<0.000000e+00> : vector<128x128xf32>
    %5 = tpu.matmul %3, %4, %cst {dimension_numbers = #tpu.dot_dimension_numbers<[1], [0], [0], [1], [0, 0, 1, 1], [], []>} : vector<128x128xf32>, vector<128x128xf32>, vector<128x128xf32> -> vector<128x128xf32>
    %c0_4 = arith.constant 0 : index
    %c0_5 = arith.constant 0 : index
    %6 = vector.load %arg7[%c0_4, %c0_5] : memref<1x128xf32, #tpu.memory_space<vmem>>, vector<1x128xf32>
    %cst_6 = arith.constant 2.000000e+00 : f32
    %7 = vector.broadcast %cst_6 : f32 to vector<128x128xf32>
    %8 = arith.mulf %7, %5 : vector<128x128xf32>
    %9 = vector.broadcast %6 : vector<1x128xf32> to vector<128x128xf32>
    %10 = arith.subf %9, %8 : vector<128x128xf32>
    %c0_7 = arith.constant 0 : index
    %c0_8 = arith.constant 0 : index
    %11 = vector.load %arg4[%c0_7, %c0_8] : memref<128x1xi32, #tpu.memory_space<vmem>>, vector<128x1xi32>
    %c0_9 = arith.constant 0 : index
    %c0_10 = arith.constant 0 : index
    %12 = vector.load %arg5[%c0_9, %c0_10] : memref<1x128xi32, #tpu.memory_space<vmem>>, vector<1x128xi32>
    %13 = vector.broadcast %11 : vector<128x1xi32> to vector<128x128xi32>
    %14 = vector.broadcast %12 : vector<1x128xi32> to vector<128x128xi32>
    %15 = arith.cmpi eq, %13, %14 : vector<128x128xi32>
    %16 = tpu.iota {dimensions = array<i32: 0>} : vector<128x128xi32>
    %17 = tpu.iota {dimensions = array<i32: 1>} : vector<128x128xi32>
    %18 = arith.subi %16, %17 : vector<128x128xi32>
    %c128_i32 = arith.constant 128 : i32
    %19 = arith.muli %arg1, %c128_i32 : i32
    %c128_i32_11 = arith.constant 128 : i32
    %20 = arith.muli %arg0, %c128_i32_11 : i32
    %21 = arith.subi %19, %20 : i32
    %22 = vector.broadcast %21 : i32 to vector<128x128xi32>
    %23 = arith.cmpi eq, %18, %22 : vector<128x128xi32>
    %cst_12 = arith.constant dense<true> : vector<128x128xi1>
    %24 = arith.xori %23, %cst_12 : vector<128x128xi1>
    %25 = arith.andi %15, %24 : vector<128x128xi1>
    %cst_13 = arith.constant -1.000000e+30 : f32
    %26 = vector.broadcast %cst_13 : f32 to vector<128x128xf32>
    %27 = arith.select %25, %10, %26 : vector<128x128xi1>, vector<128x128xf32>
    %c0_14 = arith.constant 0 : index
    %c0_15 = arith.constant 0 : index
    %28 = vector.load %arg10[%c0_14, %c0_15] : memref<128x1xf32, #tpu.memory_space<vmem>>, vector<128x1xf32>
    %cst_16 = arith.constant dense<0xFF800000> : vector<128xf32>
    %29 = vector.multi_reduction <maximumf>, %27, %cst_16 [1] : vector<128x128xf32> to vector<128xf32>
    %30 = vector.shape_cast %29 : vector<128xf32> to vector<128x1xf32>
    %31 = arith.maximumf %28, %30 : vector<128x1xf32>
    %c0_17 = arith.constant 0 : index
    %c0_18 = arith.constant 0 : index
    %32 = vector.load %arg10[%c0_17, %c0_18] : memref<128x1xf32, #tpu.memory_space<vmem>>, vector<128x1xf32>
    tpu.vector_store %arg10[%c0_17, %c0_18], %31 {strides = array<i32>} : memref<128x1xf32, #tpu.memory_space<vmem>>, vector<128x1xf32>,
    %cst_19 = arith.constant 1.000000e+30 : f32
    %33 = vector.broadcast %cst_19 : f32 to vector<128x128xf32>
    %34 = arith.select %15, %33, %10 : vector<128x128xi1>, vector<128x128xf32>
    %c0_20 = arith.constant 0 : index
    %c0_21 = arith.constant 0 : index
    %35 = vector.load %arg8[%c0_20, %c0_21] : memref<1x128xf32, #tpu.memory_space<vmem>>, vector<1x128xf32>
    %36 = vector.broadcast %35 : vector<1x128xf32> to vector<128x128xf32>
    %37 = arith.addf %34, %36 : vector<128x128xf32>
    %c0_22 = arith.constant 0 : index
    %c0_23 = arith.constant 0 : index
    %38 = vector.load %arg11[%c0_22, %c0_23] : memref<128x1xf32, #tpu.memory_space<vmem>>, vector<128x1xf32>
    %cst_24 = arith.constant dense<0x7F800000> : vector<128xf32>
    %39 = vector.multi_reduction <minimumf>, %37, %cst_24 [1] : vector<128x128xf32> to vector<128xf32>
    %40 = vector.shape_cast %39 : vector<128xf32> to vector<128x1xf32>
    %41 = arith.minimumf %38, %40 : vector<128x1xf32>
    %c0_25 = arith.constant 0 : index
    %c0_26 = arith.constant 0 : index
    %42 = vector.load %arg11[%c0_25, %c0_26] : memref<128x1xf32, #tpu.memory_space<vmem>>, vector<128x1xf32>
    tpu.vector_store %arg11[%c0_25, %c0_26], %41 {strides = array<i32>} : memref<128x1xf32, #tpu.memory_space<vmem>>, vector<128x1xf32>,
    %c0_27 = arith.constant 0 : index
    %c0_28 = arith.constant 0 : index
    %43 = vector.load %arg12[%c0_27, %c0_28] : memref<128x1xf32, #tpu.memory_space<vmem>>, vector<128x1xf32>
    %cst_29 = arith.constant dense<0xFF800000> : vector<128xf32>
    %44 = vector.multi_reduction <maximumf>, %10, %cst_29 [1] : vector<128x128xf32> to vector<128xf32>
    %45 = vector.shape_cast %44 : vector<128xf32> to vector<128x1xf32>
    %46 = arith.maximumf %43, %45 : vector<128x1xf32>
    %c0_30 = arith.constant 0 : index
    %c0_31 = arith.constant 0 : index
    %47 = vector.load %arg12[%c0_30, %c0_31] : memref<128x1xf32, #tpu.memory_space<vmem>>, vector<128x1xf32>
    tpu.vector_store %arg12[%c0_30, %c0_31], %46 {strides = array<i32>} : memref<128x1xf32, #tpu.memory_space<vmem>>, vector<128x1xf32>,
    %c0_i32_32 = arith.constant 0 : i32
    %48 = arith.cmpi eq, %arg1, %c0_i32_32 : i32
    %49 = arith.extui %48 : i1 to i32
    %c0_i32_33 = arith.constant 0 : i32
    %50 = arith.cmpi ne, %49, %c0_i32_33 : i32
    scf.if %50 {
      %c0_34 = arith.constant 0 : index
      %c0_35 = arith.constant 0 : index
      %51 = vector.load %arg6[%c0_34, %c0_35] : memref<128x1xf32, #tpu.memory_space<vmem>>, vector<128x1xf32>
      %c0_36 = arith.constant 0 : index
      %c0_37 = arith.constant 0 : index
      %52 = vector.load %arg10[%c0_36, %c0_37] : memref<128x1xf32, #tpu.memory_space<vmem>>, vector<128x1xf32>
      %53 = arith.addf %52, %51 : vector<128x1xf32>
      %cst_38 = arith.constant 0.000000e+00 : f32
      %54 = vector.broadcast %cst_38 : f32 to vector<128x1xf32>
      %55 = arith.maximumf %53, %54 : vector<128x1xf32>
      %c0_39 = arith.constant 0 : index
      %c0_40 = arith.constant 0 : index
      %56 = vector.load %arg11[%c0_39, %c0_40] : memref<128x1xf32, #tpu.memory_space<vmem>>, vector<128x1xf32>
      %c0_41 = arith.constant 0 : index
      %c0_42 = arith.constant 0 : index
      %57 = vector.load %arg12[%c0_41, %c0_42] : memref<128x1xf32, #tpu.memory_space<vmem>>, vector<128x1xf32>
      %58 = arith.minimumf %56, %57 : vector<128x1xf32>
      %59 = arith.addf %58, %51 : vector<128x1xf32>
      %cst_43 = arith.constant 0.000000e+00 : f32
      %60 = vector.broadcast %cst_43 : f32 to vector<128x1xf32>
      %61 = arith.maximumf %59, %60 : vector<128x1xf32>
      %cst_44 = arith.constant 0.000000e+00 : f32
      %62 = vector.broadcast %cst_44 : f32 to vector<128x1xf32>
      %63 = arith.cmpf oeq, %55, %62 : vector<128x1xf32>
      %64 = arith.extui %63 : vector<128x1xi1> to vector<128x1xi32>
      %65 = arith.sitofp %64 : vector<128x1xi32> to vector<128x1xf32>
      %cst_45 = arith.constant 1.000000e+00 : f32
      %66 = vector.broadcast %cst_45 : f32 to vector<128x1xf32>
      %67 = arith.subf %66, %65 : vector<128x1xf32>
      %cst_46 = arith.constant 1.000000e-16 : f32
      %68 = vector.broadcast %cst_46 : f32 to vector<128x1xf32>
      %69 = arith.mulf %65, %68 : vector<128x1xf32>
      %70 = arith.addf %55, %69 : vector<128x1xf32>
      %71 = math.sqrt %70 : vector<128x1xf32>
      %72 = arith.mulf %67, %71 : vector<128x1xf32>
      %cst_47 = arith.constant 0.000000e+00 : f32
      %73 = vector.broadcast %cst_47 : f32 to vector<128x1xf32>
      %74 = arith.cmpf oeq, %61, %73 : vector<128x1xf32>
      %75 = arith.extui %74 : vector<128x1xi1> to vector<128x1xi32>
      %76 = arith.sitofp %75 : vector<128x1xi32> to vector<128x1xf32>
      %cst_48 = arith.constant 1.000000e+00 : f32
      %77 = vector.broadcast %cst_48 : f32 to vector<128x1xf32>
      %78 = arith.subf %77, %76 : vector<128x1xf32>
      %cst_49 = arith.constant 1.000000e-16 : f32
      %79 = vector.broadcast %cst_49 : f32 to vector<128x1xf32>
      %80 = arith.mulf %76, %79 : vector<128x1xf32>
      %81 = arith.addf %61, %80 : vector<128x1xf32>
      %82 = math.sqrt %81 : vector<128x1xf32>
      %83 = arith.mulf %78, %82 : vector<128x1xf32>
      %84 = arith.subf %72, %83 : vector<128x1xf32>
      %cst_50 = arith.constant 5.000000e+00 : f32
      %85 = vector.broadcast %cst_50 : f32 to vector<128x1xf32>
      %86 = arith.addf %84, %85 : vector<128x1xf32>
      %cst_51 = arith.constant 0.000000e+00 : f32
      %87 = vector.broadcast %cst_51 : f32 to vector<128x1xf32>
      %88 = arith.maximumf %86, %87 : vector<128x1xf32>
      %c128_i32_52 = arith.constant 128 : i32
      %89 = arith.muli %arg0, %c128_i32_52 : i32
      %90 = tpu.iota {dimensions = array<i32: 0>} : vector<128x1xi32>
      %91 = vector.broadcast %89 : i32 to vector<128x1xi32>
      %92 = arith.addi %91, %90 : vector<128x1xi32>
      %c8_i32 = arith.constant 8 : i32
      %93 = vector.broadcast %c8_i32 : i32 to vector<128x1xi32>
      %94 = arith.cmpi slt, %92, %93 : vector<128x1xi32>
      %cst_53 = arith.constant 0.000000e+00 : f32
      %95 = vector.broadcast %cst_53 : f32 to vector<128x1xf32>
      %96 = arith.select %94, %88, %95 : vector<128x1xi1>, vector<128x1xf32>
      %c0_54 = arith.constant 0 : index
      %c0_55 = arith.constant 0 : index
      %97 = vector.load %arg9[%c0_54, %c0_55] : memref<128x1xf32, #tpu.memory_space<vmem>>, vector<128x1xf32>
      tpu.vector_store %arg9[%c0_54, %c0_55], %96 {strides = array<i32>} : memref<128x1xf32, #tpu.memory_space<vmem>>, vector<128x1xf32>,
    } else {
    }
    return
  }
  func.func @transform_0(%arg0: i32, %arg1: i32) -> (i32, i32) {
    %c0_i32 = arith.constant 0 : i32
    %c0_i32_0 = arith.constant 0 : i32
    return %arg0, %c0_i32 : i32, i32
  }
  func.func @transform_1(%arg0: i32, %arg1: i32) -> (i32, i32) {
    %c0_i32 = arith.constant 0 : i32
    %c0_i32_0 = arith.constant 0 : i32
    return %c0_i32, %arg1 : i32, i32
  }
  func.func @transform_2(%arg0: i32, %arg1: i32) -> (i32, i32) {
    %c0_i32 = arith.constant 0 : i32
    %c0_i32_0 = arith.constant 0 : i32
    return %arg0, %c0_i32 : i32, i32
  }
  func.func @transform_3(%arg0: i32, %arg1: i32) -> (i32, i32) {
    %c0_i32 = arith.constant 0 : i32
    %c0_i32_0 = arith.constant 0 : i32
    return %c0_i32, %arg1 : i32, i32
  }
  func.func @transform_4(%arg0: i32, %arg1: i32) -> (i32, i32) {
    %c0_i32 = arith.constant 0 : i32
    %c0_i32_0 = arith.constant 0 : i32
    return %arg0, %c0_i32 : i32, i32
  }
  func.func @transform_5(%arg0: i32, %arg1: i32) -> (i32, i32) {
    %c0_i32 = arith.constant 0 : i32
    %c0_i32_0 = arith.constant 0 : i32
    return %c0_i32, %arg1 : i32, i32
  }
  func.func @transform_6(%arg0: i32, %arg1: i32) -> (i32, i32) {
    %c0_i32 = arith.constant 0 : i32
    %c0_i32_0 = arith.constant 0 : i32
    return %c0_i32, %arg1 : i32, i32
  }
  func.func @transform_7(%arg0: i32, %arg1: i32) -> (i32, i32) {
    %c0_i32 = arith.constant 0 : i32
    %c0_i32_0 = arith.constant 0 : i32
    return %arg0, %c0_i32 : i32, i32
  }
}

</mosaic_0001>

<llo_original>
// kernel: batch_hard_triplet_loss.1
$region0: #{batch_hard_triplet_loss.1}
  #allocation0 [shape = 'u32[]', space=smem, size = 0x4, offset = 0x4, fixed_abs, tag = 'smem constant byte address 0x4 - core index']
  #allocation1 [shape = 'u32[144,128]{1,0:T(1,128)}', space=vmem, size = 0x12000, scoped, tag = 'internal scratch']
  #allocation2 [shape = 'f32[128,1]{1,0:T(8,128)}', space=vmem, size = 0x10000, scoped, tag = 'scratch operand']
  #allocation3 [shape = 'f32[128,1]{1,0:T(8,128)}', space=vmem, size = 0x10000, scoped, tag = 'scratch operand']
  #allocation4 [shape = 'f32[128,1]{1,0:T(8,128)}', space=vmem, size = 0x10000, scoped, tag = 'scratch operand']
  %s0 = inlined_call_operand.vmem [shape: f32[128,128], index: 0, kind: input, shape index: {}]
  %s1 = inlined_call_operand.vmem [shape: f32[128,128], index: 1, kind: input, shape index: {}]
  %s2 = inlined_call_operand.vmem [shape: s32[128,1], index: 2, kind: input, shape index: {}]
  %s3 = inlined_call_operand.vmem [shape: s32[1,128], index: 3, kind: input, shape index: {}]
  %s4 = inlined_call_operand.vmem [shape: f32[128,1], index: 4, kind: input, shape index: {}]
  %s5 = inlined_call_operand.vmem [shape: f32[1,128], index: 5, kind: input, shape index: {}]
  %s6 = inlined_call_operand.vmem [shape: f32[1,128], index: 6, kind: input, shape index: {}]
  %s7 = inlined_call_operand.vmem [shape: f32[128,1], index: 7, kind: output, shape index: {}]
  %s8 = sld [smem:[#allocation0]]
  $region46: #{batch_hard_triplet_loss.1} parent=0
    _
  %s10 = ssub.s32 1, %s8
  %s11 = scalar_select 0, %s10, %s8
  // Predicated region
  $region2: #{batch_hard_triplet_loss.1} parent=0 // pred_check
    _
  $region3: #{batch_hard_triplet_loss.1} parent=0 // pred_check_branch
    %13 = sbr.rel (0) target = $region5
  $region4: #{batch_hard_triplet_loss.1} parent=0 // pred_region
    _
  $region5: #{batch_hard_triplet_loss.1} parent=0 // pred_fallthru
    _
  // Predicated region
  $region6: #{batch_hard_triplet_loss.1} parent=0 // pred_check
    _
  $region7: #{batch_hard_triplet_loss.1} parent=0 // pred_check_branch
    %15 = sbr.rel (0) target = $region9
  $region8: #{batch_hard_triplet_loss.1} parent=0 // pred_region
    _
  $region9: #{batch_hard_triplet_loss.1} parent=0 // pred_fallthru
    _
  // Predicated region
  $region10: #{batch_hard_triplet_loss.1} parent=0 // pred_check
    _
  $region11: #{batch_hard_triplet_loss.1} parent=0 // pred_check_branch
    %17 = sbr.rel (0) target = $region13
  $region12: #{batch_hard_triplet_loss.1} parent=0 // pred_region
    _
  $region13: #{batch_hard_triplet_loss.1} parent=0 // pred_fallthru
    _
  // Predicated region
  $region14: #{batch_hard_triplet_loss.1} parent=0 // pred_check
    _
  $region15: #{batch_hard_triplet_loss.1} parent=0 // pred_check_branch
    %19 = sbr.rel (0) target = $region17
  $region16: #{batch_hard_triplet_loss.1} parent=0 // pred_region
    _
  $region17: #{batch_hard_triplet_loss.1} parent=0 // pred_fallthru
    _
  // Predicated region
  $region18: #{batch_hard_triplet_loss.1} parent=0 // pred_check
    _
  $region19: #{batch_hard_triplet_loss.1} parent=0 // pred_check_branch
    %21 = sbr.rel (0) target = $region21
  $region20: #{batch_hard_triplet_loss.1} parent=0 // pred_region
    _
  $region21: #{batch_hard_triplet_loss.1} parent=0 // pred_fallthru
    _
  // Predicated region
  $region22: #{batch_hard_triplet_loss.1} parent=0 // pred_check
    _
  $region23: #{batch_hard_triplet_loss.1} parent=0 // pred_check_branch
    %23 = sbr.rel (0) target = $region25
  $region24: #{batch_hard_triplet_loss.1} parent=0 // pred_region
    _
  $region25: #{batch_hard_triplet_loss.1} parent=0 // pred_fallthru
    _
  // Predicated region
  $region26: #{batch_hard_triplet_loss.1} parent=0 // pred_check
    _
  $region27: #{batch_hard_triplet_loss.1} parent=0 // pred_check_branch
    %25 = sbr.rel (0) target = $region29
  $region28: #{batch_hard_triplet_loss.1} parent=0 // pred_region
    _
  $region29: #{batch_hard_triplet_loss.1} parent=0 // pred_fallthru
    _
  %p26 = scmp.eq.s32.totalorder 0, 0
  // Predicated region
  $region30: #{batch_hard_triplet_loss.1} parent=0 // pred_check
    %p27 = pneg %p26
  $region31: #{batch_hard_triplet_loss.1} parent=0 // pred_check_branch
    %29 = sbr.rel (%p27) target = $region33
  $region32: #{batch_hard_triplet_loss.1} parent=0 // pred_region
    %vm30 = vcmask 7168
    %31 = vst.msk [vmem:[#allocation2] sm:$0xff] %vm30, -1e+30
    %32 = vst.msk [vmem:[#allocation2 + $0x8] sm:$0xff] %vm30, -1e+30
    %33 = vst.msk [vmem:[#allocation2 + $0x10] sm:$0xff] %vm30, -1e+30
    %34 = vst.msk [vmem:[#allocation2 + $0x18] sm:$0xff] %vm30, -1e+30
    %35 = vst.msk [vmem:[#allocation2 + $0x20] sm:$0xff] %vm30, -1e+30
    %36 = vst.msk [vmem:[#allocation2 + $0x28] sm:$0xff] %vm30, -1e+30
    %37 = vst.msk [vmem:[#allocation2 + $0x30] sm:$0xff] %vm30, -1e+30
    %38 = vst.msk [vmem:[#allocation2 + $0x38] sm:$0xff] %vm30, -1e+30
    %39 = vst.msk [vmem:[#allocation2 + $0x40] sm:$0xff] %vm30, -1e+30
    %40 = vst.msk [vmem:[#allocation2 + $0x48] sm:$0xff] %vm30, -1e+30
    %41 = vst.msk [vmem:[#allocation2 + $0x50] sm:$0xff] %vm30, -1e+30
    %42 = vst.msk [vmem:[#allocation2 + $0x58] sm:$0xff] %vm30, -1e+30
    %43 = vst.msk [vmem:[#allocation2 + $0x60] sm:$0xff] %vm30, -1e+30
    %44 = vst.msk [vmem:[#allocation2 + $0x68] sm:$0xff] %vm30, -1e+30
    %45 = vst.msk [vmem:[#allocation2 + $0x70] sm:$0xff] %vm30, -1e+30
    %46 = vst.msk [vmem:[#allocation2 + $0x78] sm:$0xff] %vm30, -1e+30
    %47 = vst.msk [vmem:[#allocation3] sm:$0xff] %vm30, 1e+30
    %48 = vst.msk [vmem:[#allocation3 + $0x8] sm:$0xff] %vm30, 1e+30
    %49 = vst.msk [vmem:[#allocation3 + $0x10] sm:$0xff] %vm30, 1e+30
    %50 = vst.msk [vmem:[#allocation3 + $0x18] sm:$0xff] %vm30, 1e+30
    %51 = vst.msk [vmem:[#allocation3 + $0x20] sm:$0xff] %vm30, 1e+30
    %52 = vst.msk [vmem:[#allocation3 + $0x28] sm:$0xff] %vm30, 1e+30
    %53 = vst.msk [vmem:[#allocation3 + $0x30] sm:$0xff] %vm30, 1e+30
    %54 = vst.msk [vmem:[#allocation3 + $0x38] sm:$0xff] %vm30, 1e+30
    %55 = vst.msk [vmem:[#allocation3 + $0x40] sm:$0xff] %vm30, 1e+30
    %56 = vst.msk [vmem:[#allocation3 + $0x48] sm:$0xff] %vm30, 1e+30
    %57 = vst.msk [vmem:[#allocation3 + $0x50] sm:$0xff] %vm30, 1e+30
    %58 = vst.msk [vmem:[#allocation3 + $0x58] sm:$0xff] %vm30, 1e+30
    %59 = vst.msk [vmem:[#allocation3 + $0x60] sm:$0xff] %vm30, 1e+30
    %60 = vst.msk [vmem:[#allocation3 + $0x68] sm:$0xff] %vm30, 1e+30
    %61 = vst.msk [vmem:[#allocation3 + $0x70] sm:$0xff] %vm30, 1e+30
    %62 = vst.msk [vmem:[#allocation3 + $0x78] sm:$0xff] %vm30, 1e+30
    %63 = vst.msk [vmem:[#allocation4] sm:$0xff] %vm30, -1e+30
    %64 = vst.msk [vmem:[#allocation4 + $0x8] sm:$0xff] %vm30, -1e+30
    %65 = vst.msk [vmem:[#allocation4 + $0x10] sm:$0xff] %vm30, -1e+30
    %66 = vst.msk [vmem:[#allocation4 + $0x18] sm:$0xff] %vm30, -1e+30
    %67 = vst.msk [vmem:[#allocation4 + $0x20] sm:$0xff] %vm30, -1e+30
    %68 = vst.msk [vmem:[#allocation4 + $0x28] sm:$0xff] %vm30, -1e+30
    %69 = vst.msk [vmem:[#allocation4 + $0x30] sm:$0xff] %vm30, -1e+30
    %70 = vst.msk [vmem:[#allocation4 + $0x38] sm:$0xff] %vm30, -1e+30
    %71 = vst.msk [vmem:[#allocation4 + $0x40] sm:$0xff] %vm30, -1e+30
    %72 = vst.msk [vmem:[#allocation4 + $0x48] sm:$0xff] %vm30, -1e+30
    %73 = vst.msk [vmem:[#allocation4 + $0x50] sm:$0xff] %vm30, -1e+30
    %74 = vst.msk [vmem:[#allocation4 + $0x58] sm:$0xff] %vm30, -1e+30
    %75 = vst.msk [vmem:[#allocation4 + $0x60] sm:$0xff] %vm30, -1e+30
    %76 = vst.msk [vmem:[#allocation4 + $0x68] sm:$0xff] %vm30, -1e+30
    %77 = vst.msk [vmem:[#allocation4 + $0x70] sm:$0xff] %vm30, -1e+30
    %78 = vst.msk [vmem:[#allocation4 + $0x78] sm:$0xff] %vm30, -1e+30
  $region33: #{batch_hard_triplet_loss.1} parent=0 // pred_fallthru
    _
  %v79 = vld [vmem:[%s0] sm:$0xff]
  %v80 = vld [vmem:[%s0 + $0x8] sm:$0xff]
  %v81 = vld [vmem:[%s0 + $0x10] sm:$0xff]
  %v82 = vld [vmem:[%s0 + $0x18] sm:$0xff]
  %v83 = vld [vmem:[%s0 + $0x20] sm:$0xff]
  %v84 = vld [vmem:[%s0 + $0x28] sm:$0xff]
  %v85 = vld [vmem:[%s0 + $0x30] sm:$0xff]
  %v86 = vld [vmem:[%s0 + $0x38] sm:$0xff]
  %v87 = vld [vmem:[%s0 + $0x40] sm:$0xff]
  %v88 = vld [vmem:[%s0 + $0x48] sm:$0xff]
  %v89 = vld [vmem:[%s0 + $0x50] sm:$0xff]
  %v90 = vld [vmem:[%s0 + $0x58] sm:$0xff]
  %v91 = vld [vmem:[%s0 + $0x60] sm:$0xff]
  %v92 = vld [vmem:[%s0 + $0x68] sm:$0xff]
  %v93 = vld [vmem:[%s0 + $0x70] sm:$0xff]
  %v94 = vld [vmem:[%s0 + $0x78] sm:$0xff]
  %v95 = vld [vmem:[%s1] sm:$0xff]
  %v96 = vld [vmem:[%s1 + $0x8] sm:$0xff]
  %v97 = vld [vmem:[%s1 + $0x10] sm:$0xff]
  %v98 = vld [vmem:[%s1 + $0x18] sm:$0xff]
  %v99 = vld [vmem:[%s1 + $0x20] sm:$0xff]
  %v100 = vld [vmem:[%s1 + $0x28] sm:$0xff]
  %v101 = vld [vmem:[%s1 + $0x30] sm:$0xff]
  %v102 = vld [vmem:[%s1 + $0x38] sm:$0xff]
  %v103 = vld [vmem:[%s1 + $0x40] sm:$0xff]
  %v104 = vld [vmem:[%s1 + $0x48] sm:$0xff]
  %v105 = vld [vmem:[%s1 + $0x50] sm:$0xff]
  %v106 = vld [vmem:[%s1 + $0x58] sm:$0xff]
  %v107 = vld [vmem:[%s1 + $0x60] sm:$0xff]
  %v108 = vld [vmem:[%s1 + $0x68] sm:$0xff]
  %v109 = vld [vmem:[%s1 + $0x70] sm:$0xff]
  %v110 = vld [vmem:[%s1 + $0x78] sm:$0xff]
  %111 = vmatprep.subr.mxu0 0.0
  %112 = vmatpush1.msra.mxu0 %v95
  %113 = vmatprep.subr.mxu0 0.0
  %114 = vmatpush1.msra.mxu0 %v96
  %115 = vmatprep.subr.mxu0 0.0
  %116 = vmatpush1.msra.mxu0 %v97
  %117 = vmatprep.subr.mxu0 0.0
  %118 = vmatpush1.msra.mxu0 %v98
  %119 = vmatprep.subr.mxu0 0.0
  %120 = vmatpush1.msra.mxu0 %v99
  %121 = vmatprep.subr.mxu0 0.0
  %122 = vmatpush1.msra.mxu0 %v100
  %123 = vmatprep.subr.mxu0 0.0
  %124 = vmatpush1.msra.mxu0 %v101
  %125 = vmatprep.subr.mxu0 0.0
  %126 = vmatpush1.msra.mxu0 %v102
  %127 = vmatprep.subr.mxu0 0.0
  %128 = vmatpush1.msra.mxu0 %v103
  %129 = vmatprep.subr.mxu0 0.0
  %130 = vmatpush1.msra.mxu0 %v104
  %131 = vmatprep.subr.mxu0 0.0
  %132 = vmatpush1.msra.mxu0 %v105
  %133 = vmatprep.subr.mxu0 0.0
  %134 = vmatpush1.msra.mxu0 %v106
  %135 = vmatprep.subr.mxu0 0.0
  %136 = vmatpush1.msra.mxu0 %v107
  %137 = vmatprep.subr.mxu0 0.0
  %138 = vmatpush1.msra.mxu0 %v108
  %139 = vmatprep.subr.mxu0 0.0
  %140 = vmatpush1.msra.mxu0 %v109
  %141 = vmatprep.subr.mxu0 0.0
  %142 = vmatpush1.msra.mxu0 %v110
  %143 = vmatprep.subr.mxu0 0.0
  %144 = vmatpush1.msra.mxu0 0.0
  %145 = vmatprep.subr.mxu0 0.0
  %146 = vmatpush1.msra.mxu0 0.0
  %147 = vmatprep.subr.mxu0 0.0
  %148 = vmatpush1.msra.mxu0 0.0
  %149 = vmatprep.subr.mxu0 0.0
  %150 = vmatpush1.msra.mxu0 0.0
  %151 = vmatprep.subr.mxu0 0.0
  %152 = vmatpush1.msra.mxu0 0.0
  %153 = vmatprep.subr.mxu0 0.0
  %154 = vmatpush1.msra.mxu0 0.0
  %155 = vmatprep.subr.mxu0 0.0
  %156 = vmatpush1.msra.mxu0 0.0
  %157 = vmatprep.subr.mxu0 0.0
  %158 = vmatpush1.msra.mxu0 0.0
  %159 = vmatprep.subr.mxu0 0.0
  %160 = vmatpush1.msra.mxu0 0.0
  %161 = vmatprep.subr.mxu0 0.0
  %162 = vmatpush1.msra.mxu0 0.0
  %163 = vmatprep.subr.mxu0 0.0
  %164 = vmatpush1.msra.mxu0 0.0
  %165 = vmatprep.subr.mxu0 0.0
  %166 = vmatpush1.msra.mxu0 0.0
  %167 = vmatprep.subr.mxu0 0.0
  %168 = vmatpush1.msra.mxu0 0.0
  %169 = vmatprep.subr.mxu0 0.0
  %170 = vmatpush1.msra.mxu0 0.0
  %171 = vmatprep.subr.mxu0 0.0
  %172 = vmatpush1.msra.mxu0 0.0
  %173 = vmatprep.subr.mxu0 0.0
  %174 = vmatpush1.msra.mxu0 0.0
  %175 = vmatprep.mubr.f32.mxu0 0.0
  %176 = vmatmul.mubr.f32.gmra.mrb[0].mxu0 %v79
  %v177 = vpop.f32.mrb[0].mxu0
  %v178 = vadd.f32 0.0, %v177
  %v179 = vpop.f32.mrb[0].mxu0
  %180 = vmatprep.mubr.f32.mxu0 0.0
  %181 = vmatmul.mubr.f32.gmra.mrb[0].mxu0 %v80
  %v182 = vpop.f32.mrb[0].mxu0
  %v183 = vadd.f32 0.0, %v182
  %v184 = vpop.f32.mrb[0].mxu0
  %185 = vmatprep.mubr.f32.mxu0 0.0
  %186 = vmatmul.mubr.f32.gmra.mrb[0].mxu0 %v81
  %v187 = vpop.f32.mrb[0].mxu0
  %v188 = vadd.f32 0.0, %v187
  %v189 = vpop.f32.mrb[0].mxu0
  %190 = vmatprep.mubr.f32.mxu0 0.0
  %191 = vmatmul.mubr.f32.gmra.mrb[0].mxu0 %v82
  %v192 = vpop.f32.mrb[0].mxu0
  %v193 = vadd.f32 0.0, %v192
  %v194 = vpop.f32.mrb[0].mxu0
  %195 = vmatprep.mubr.f32.mxu0 0.0
  %196 = vmatmul.mubr.f32.gmra.mrb[0].mxu0 %v83
  %v197 = vpop.f32.mrb[0].mxu0
  %v198 = vadd.f32 0.0, %v197
  %v199 = vpop.f32.mrb[0].mxu0
  %200 = vmatprep.mubr.f32.mxu0 0.0
  %201 = vmatmul.mubr.f32.gmra.mrb[0].mxu0 %v84
  %v202 = vpop.f32.mrb[0].mxu0
  %v203 = vadd.f32 0.0, %v202
  %v204 = vpop.f32.mrb[0].mxu0
  %205 = vmatprep.mubr.f32.mxu0 0.0
  %206 = vmatmul.mubr.f32.gmra.mrb[0].mxu0 %v85
  %v207 = vpop.f32.mrb[0].mxu0
  %v208 = vadd.f32 0.0, %v207
  %v209 = vpop.f32.mrb[0].mxu0
  %210 = vmatprep.mubr.f32.mxu0 0.0
  %211 = vmatmul.mubr.f32.gmra.mrb[0].mxu0 %v86
  %v212 = vpop.f32.mrb[0].mxu0
  %v213 = vadd.f32 0.0, %v212
  %v214 = vpop.f32.mrb[0].mxu0
  %215 = vmatprep.mubr.f32.mxu0 0.0
  %216 = vmatmul.mubr.f32.gmra.mrb[0].mxu0 %v87
  %v217 = vpop.f32.mrb[0].mxu0
  %v218 = vadd.f32 0.0, %v217
  %v219 = vpop.f32.mrb[0].mxu0
  %220 = vmatprep.mubr.f32.mxu0 0.0
  %221 = vmatmul.mubr.f32.gmra.mrb[0].mxu0 %v88
  %v222 = vpop.f32.mrb[0].mxu0
  %v223 = vadd.f32 0.0, %v222
  %v224 = vpop.f32.mrb[0].mxu0
  %225 = vmatprep.mubr.f32.mxu0 0.0
  %226 = vmatmul.mubr.f32.gmra.mrb[0].mxu0 %v89
  %v227 = vpop.f32.mrb[0].mxu0
  %v228 = vadd.f32 0.0, %v227
  %v229 = vpop.f32.mrb[0].mxu0
  %230 = vmatprep.mubr.f32.mxu0 0.0
  %231 = vmatmul.mubr.f32.gmra.mrb[0].mxu0 %v90
  %v232 = vpop.f32.mrb[0].mxu0
  %v233 = vadd.f32 0.0, %v232
  %v234 = vpop.f32.mrb[0].mxu0
  %235 = vmatprep.mubr.f32.mxu0 0.0
  %236 = vmatmul.mubr.f32.gmra.mrb[0].mxu0 %v91
  %v237 = vpop.f32.mrb[0].mxu0
  %v238 = vadd.f32 0.0, %v237
  %v239 = vpop.f32.mrb[0].mxu0
  %240 = vmatprep.mubr.f32.mxu0 0.0
  %241 = vmatmul.mubr.f32.gmra.mrb[0].mxu0 %v92
  %v242 = vpop.f32.mrb[0].mxu0
  %v243 = vadd.f32 0.0, %v242
  %v244 = vpop.f32.mrb[0].mxu0
  %245 = vmatprep.mubr.f32.mxu0 0.0
  %246 = vmatmul.mubr.f32.gmra.mrb[0].mxu0 %v93
  %v247 = vpop.f32.mrb[0].mxu0
  %v248 = vadd.f32 0.0, %v247
  %v249 = vpop.f32.mrb[0].mxu0
  %250 = vmatprep.mubr.f32.mxu0 0.0
  %251 = vmatmul.mubr.f32.gmra.mrb[0].mxu0 %v94
  %v252 = vpop.f32.mrb[0].mxu0
  %v253 = vadd.f32 0.0, %v252
  %v254 = vpop.f32.mrb[0].mxu0
  %255 = vdwg.mxu0
  %v256 = vld [vmem:[%s5] sm:$0x1]
  %v257 = vmul.f32 %v178, 2.0
  %v258 = vmul.f32 %v183, 2.0
  %v259 = vmul.f32 %v188, 2.0
  %v260 = vmul.f32 %v193, 2.0
  %v261 = vmul.f32 %v198, 2.0
  %v262 = vmul.f32 %v203, 2.0
  %v263 = vmul.f32 %v208, 2.0
  %v264 = vmul.f32 %v213, 2.0
  %v265 = vmul.f32 %v218, 2.0
  %v266 = vmul.f32 %v223, 2.0
  %v267 = vmul.f32 %v228, 2.0
  %v268 = vmul.f32 %v233, 2.0
  %v269 = vmul.f32 %v238, 2.0
  %v270 = vmul.f32 %v243, 2.0
  %v271 = vmul.f32 %v248, 2.0
  %v272 = vmul.f32 %v253, 2.0
  %v274 = vlaneseq
  %v275 = vshrl.u32 %v274, 7
  %v276 = vsub.s32 0, %v275
  %v277 = vrot.slane %v256, %v276
  %v279 = vsub.f32 %v277, %v257
  %v280 = vsub.f32 %v277, %v258
  %v281 = vsub.f32 %v277, %v259
  %v282 = vsub.f32 %v277, %v260
  %v283 = vsub.f32 %v277, %v261
  %v284 = vsub.f32 %v277, %v262
  %v285 = vsub.f32 %v277, %v263
  %v286 = vsub.f32 %v277, %v264
  %v287 = vsub.f32 %v277, %v265
  %v288 = vsub.f32 %v277, %v266
  %v289 = vsub.f32 %v277, %v267
  %v290 = vsub.f32 %v277, %v268
  %v291 = vsub.f32 %v277, %v269
  %v292 = vsub.f32 %v277, %v270
  %v293 = vsub.f32 %v277, %v271
  %v294 = vsub.f32 %v277, %v272
  %v295 = vld [vmem:[%s2] sm:$0xff]
  %v296 = vld [vmem:[%s2 + $0x8] sm:$0xff]
  %v297 = vld [vmem:[%s2 + $0x10] sm:$0xff]
  %v298 = vld [vmem:[%s2 + $0x18] sm:$0xff]
  %v299 = vld [vmem:[%s2 + $0x20] sm:$0xff]
  %v300 = vld [vmem:[%s2 + $0x28] sm:$0xff]
  %v301 = vld [vmem:[%s2 + $0x30] sm:$0xff]
  %v302 = vld [vmem:[%s2 + $0x38] sm:$0xff]
  %v303 = vld [vmem:[%s2 + $0x40] sm:$0xff]
  %v304 = vld [vmem:[%s2 + $0x48] sm:$0xff]
  %v305 = vld [vmem:[%s2 + $0x50] sm:$0xff]
  %v306 = vld [vmem:[%s2 + $0x58] sm:$0xff]
  %v307 = vld [vmem:[%s2 + $0x60] sm:$0xff]
  %v308 = vld [vmem:[%s2 + $0x68] sm:$0xff]
  %v309 = vld [vmem:[%s2 + $0x70] sm:$0xff]
  %v310 = vld [vmem:[%s2 + $0x78] sm:$0xff]
  %v311 = vld [vmem:[%s3] sm:$0x1]
  %312 = vset.pattern.permute.xlu0 0
  %313 = vperm.xlu0 %312, %v295
  %v314 = vpop.permute.xlu0 %313
  %315 = vset.pattern.permute.xlu0 0
  %316 = vperm.xlu0 %315, %v296
  %v317 = vpop.permute.xlu0 %316
  %318 = vset.pattern.permute.xlu0 0
  %319 = vperm.xlu0 %318, %v297
  %v320 = vpop.permute.xlu0 %319
  %321 = vset.pattern.permute.xlu0 0
  %322 = vperm.xlu0 %321, %v298
  %v323 = vpop.permute.xlu0 %322
  %324 = vset.pattern.permute.xlu0 0
  %325 = vperm.xlu0 %324, %v299
  %v326 = vpop.permute.xlu0 %325
  %327 = vset.pattern.permute.xlu0 0
  %328 = vperm.xlu0 %327, %v300
  %v329 = vpop.permute.xlu0 %328
  %330 = vset.pattern.permute.xlu0 0
  %331 = vperm.xlu0 %330, %v301
  %v332 = vpop.permute.xlu0 %331
  %333 = vset.pattern.permute.xlu0 0
  %334 = vperm.xlu0 %333, %v302
  %v335 = vpop.permute.xlu0 %334
  %336 = vset.pattern.permute.xlu0 0
  %337 = vperm.xlu0 %336, %v303
  %v338 = vpop.permute.xlu0 %337
  %339 = vset.pattern.permute.xlu0 0
  %340 = vperm.xlu0 %339, %v304
  %v341 = vpop.permute.xlu0 %340
  %342 = vset.pattern.permute.xlu0 0
  %343 = vperm.xlu0 %342, %v305
  %v344 = vpop.permute.xlu0 %343
  %345 = vset.pattern.permute.xlu0 0
  %346 = vperm.xlu0 %345, %v306
  %v347 = vpop.permute.xlu0 %346
  %348 = vset.pattern.permute.xlu0 0
  %349 = vperm.xlu0 %348, %v307
  %v350 = vpop.permute.xlu0 %349
  %351 = vset.pattern.permute.xlu0 0
  %352 = vperm.xlu0 %351, %v308
  %v353 = vpop.permute.xlu0 %352
  %354 = vset.pattern.permute.xlu0 0
  %355 = vperm.xlu0 %354, %v309
  %v356 = vpop.permute.xlu0 %355
  %357 = vset.pattern.permute.xlu0 0
  %358 = vperm.xlu0 %357, %v310
  %v359 = vpop.permute.xlu0 %358
  %v360 = vlaneseq
  %v361 = vshrl.u32 %v360, 7
  %v362 = vsub.s32 0, %v361
  %v363 = vrot.slane %v311, %v362
  %vm364 = vcmp.eq.s32.totalorder %v314, %v363
  %vm365 = vcmp.eq.s32.totalorder %v317, %v363
  %vm366 = vcmp.eq.s32.totalorder %v320, %v363
  %vm367 = vcmp.eq.s32.totalorder %v323, %v363
  %vm368 = vcmp.eq.s32.totalorder %v326, %v363
  %vm369 = vcmp.eq.s32.totalorder %v329, %v363
  %vm370 = vcmp.eq.s32.totalorder %v332, %v363
  %vm371 = vcmp.eq.s32.totalorder %v335, %v363
  %vm372 = vcmp.eq.s32.totalorder %v338, %v363
  %vm373 = vcmp.eq.s32.totalorder %v341, %v363
  %vm374 = vcmp.eq.s32.totalorder %v344, %v363
  %vm375 = vcmp.eq.s32.totalorder %v347, %v363
  %vm376 = vcmp.eq.s32.totalorder %v350, %v363
  %vm377 = vcmp.eq.s32.totalorder %v353, %v363
  %vm378 = vcmp.eq.s32.totalorder %v356, %v363
  %vm379 = vcmp.eq.s32.totalorder %v359, %v363
  %v380 = vlaneseq
  %v381 = vshrl.u32 %v380, 7
  %v382 = vadd.s32 %v381, 8
  %v383 = vadd.s32 %v381, 16
  %v384 = vadd.s32 %v381, 24
  %v385 = vadd.s32 %v381, 32
  %v386 = vadd.s32 %v381, 40
  %v387 = vadd.s32 %v381, 48
  %v388 = vadd.s32 %v381, 56
  %v389 = vadd.s32 %v381, 64
  %v390 = vadd.s32 %v381, 72
  %v391 = vadd.s32 %v381, 80
  %v392 = vadd.s32 %v381, 88
  %v393 = vadd.s32 %v381, 96
  %v394 = vadd.s32 %v381, 104
  %v395 = vadd.s32 %v381, 112
  %v396 = vadd.s32 %v381, 120
  %v397 = vlaneseq
  %v398 = vand.u32 %v397, 127
  %v399 = vsub.s32 %v381, %v398
  %v400 = vsub.s32 %v382, %v398
  %v401 = vsub.s32 %v383, %v398
  %v402 = vsub.s32 %v384, %v398
  %v403 = vsub.s32 %v385, %v398
  %v404 = vsub.s32 %v386, %v398
  %v405 = vsub.s32 %v387, %v398
  %v406 = vsub.s32 %v388, %v398
  %v407 = vsub.s32 %v389, %v398
  %v408 = vsub.s32 %v390, %v398
  %v409 = vsub.s32 %v391, %v398
  %v410 = vsub.s32 %v392, %v398
  %v411 = vsub.s32 %v393, %v398
  %v412 = vsub.s32 %v394, %v398
  %v413 = vsub.s32 %v395, %v398
  %v414 = vsub.s32 %v396, %v398
  %s415 = smul.u32 0, 128
  %s416 = smul.u32 0, 128
  %s417 = ssub.s32 %s415, %s416
  %v418 = vstv %s417
  %vm419 = vcmp.eq.s32.totalorder %v399, %v418
  %vm420 = vcmp.eq.s32.totalorder %v400, %v418
  %vm421 = vcmp.eq.s32.totalorder %v401, %v418
  %vm422 = vcmp.eq.s32.totalorder %v402, %v418
  %vm423 = vcmp.eq.s32.totalorder %v403, %v418
  %vm424 = vcmp.eq.s32.totalorder %v404, %v418
  %vm425 = vcmp.eq.s32.totalorder %v405, %v418
  %vm426 = vcmp.eq.s32.totalorder %v406, %v418
  %vm427 = vcmp.eq.s32.totalorder %v407, %v418
  %vm428 = vcmp.eq.s32.totalorder %v408, %v418
  %vm429 = vcmp.eq.s32.totalorder %v409, %v418
  %vm430 = vcmp.eq.s32.totalorder %v410, %v418
  %vm431 = vcmp.eq.s32.totalorder %v411, %v418
  %vm432 = vcmp.eq.s32.totalorder %v412, %v418
  %vm433 = vcmp.eq.s32.totalorder %v413, %v418
  %vm434 = vcmp.eq.s32.totalorder %v414, %v418
  %vm435 = vmxor %vm419, 1
  %vm436 = vmxor %vm420, 1
  %vm437 = vmxor %vm421, 1
  %vm438 = vmxor %vm422, 1
  %vm439 = vmxor %vm423, 1
  %vm440 = vmxor %vm424, 1
  %vm441 = vmxor %vm425, 1
  %vm442 = vmxor %vm426, 1
  %vm443 = vmxor %vm427, 1
  %vm444 = vmxor %vm428, 1
  %vm445 = vmxor %vm429, 1
  %vm446 = vmxor %vm430, 1
  %vm447 = vmxor %vm431, 1
  %vm448 = vmxor %vm432, 1
  %vm449 = vmxor %vm433, 1
  %vm450 = vmxor %vm434, 1
  %vm451 = vmand %vm364, %vm435
  %vm452 = vmand %vm365, %vm436
  %vm453 = vmand %vm366, %vm437
  %vm454 = vmand %vm367, %vm438
  %vm455 = vmand %vm368, %vm439
  %vm456 = vmand %vm369, %vm440
  %vm457 = vmand %vm370, %vm441
  %vm458 = vmand %vm371, %vm442
  %vm459 = vmand %vm372, %vm443
  %vm460 = vmand %vm373, %vm444
  %vm461 = vmand %vm374, %vm445
  %vm462 = vmand %vm375, %vm446
  %vm463 = vmand %vm376, %vm447
  %vm464 = vmand %vm377, %vm448
  %vm465 = vmand %vm378, %vm449
  %vm466 = vmand %vm379, %vm450
  %v467 = vsel %vm451, %v279, -1e+30
  %v468 = vsel %vm452, %v280, -1e+30
  %v469 = vsel %vm453, %v281, -1e+30
  %v470 = vsel %vm454, %v282, -1e+30
  %v471 = vsel %vm455, %v283, -1e+30
  %v472 = vsel %vm456, %v284, -1e+30
  %v473 = vsel %vm457, %v285, -1e+30
  %v474 = vsel %vm458, %v286, -1e+30
  %v475 = vsel %vm459, %v287, -1e+30
  %v476 = vsel %vm460, %v288, -1e+30
  %v477 = vsel %vm461, %v289, -1e+30
  %v478 = vsel %vm462, %v290, -1e+30
  %v479 = vsel %vm463, %v291, -1e+30
  %v480 = vsel %vm464, %v292, -1e+30
  %v481 = vsel %vm465, %v293, -1e+30
  %v482 = vsel %vm466, %v294, -1e+30
  %v483 = vld [vmem:[#allocation2] sm:$0xff]
  %v484 = vld [vmem:[#allocation2 + $0x8] sm:$0xff]
  %v485 = vld [vmem:[#allocation2 + $0x10] sm:$0xff]
  %v486 = vld [vmem:[#allocation2 + $0x18] sm:$0xff]
  %v487 = vld [vmem:[#allocation2 + $0x20] sm:$0xff]
  %v488 = vld [vmem:[#allocation2 + $0x28] sm:$0xff]
  %v489 = vld [vmem:[#allocation2 + $0x30] sm:$0xff]
  %v490 = vld [vmem:[#allocation2 + $0x38] sm:$0xff]
  %v491 = vld [vmem:[#allocation2 + $0x40] sm:$0xff]
  %v492 = vld [vmem:[#allocation2 + $0x48] sm:$0xff]
  %v493 = vld [vmem:[#allocation2 + $0x50] sm:$0xff]
  %v494 = vld [vmem:[#allocation2 + $0x58] sm:$0xff]
  %v495 = vld [vmem:[#allocation2 + $0x60] sm:$0xff]
  %v496 = vld [vmem:[#allocation2 + $0x68] sm:$0xff]
  %v497 = vld [vmem:[#allocation2 + $0x70] sm:$0xff]
  %v498 = vld [vmem:[#allocation2 + $0x78] sm:$0xff]
  %499 = vmax.xlane.f32.xlu0 %v467
  %v500 = vpop.xlane.xlu0 %499
  %501 = vmax.xlane.f32.xlu0 %v468
  %v502 = vpop.xlane.xlu0 %501
  %503 = vmax.xlane.f32.xlu0 %v469
  %v504 = vpop.xlane.xlu0 %503
  %505 = vmax.xlane.f32.xlu0 %v470
  %v506 = vpop.xlane.xlu0 %505
  %507 = vmax.xlane.f32.xlu0 %v471
  %v508 = vpop.xlane.xlu0 %507
  %509 = vmax.xlane.f32.xlu0 %v472
  %v510 = vpop.xlane.xlu0 %509
  %511 = vmax.xlane.f32.xlu0 %v473
  %v512 = vpop.xlane.xlu0 %511
  %513 = vmax.xlane.f32.xlu0 %v474
  %v514 = vpop.xlane.xlu0 %513
  %515 = vmax.xlane.f32.xlu0 %v475
  %v516 = vpop.xlane.xlu0 %515
  %517 = vmax.xlane.f32.xlu0 %v476
  %v518 = vpop.xlane.xlu0 %517
  %519 = vmax.xlane.f32.xlu0 %v477
  %v520 = vpop.xlane.xlu0 %519
  %521 = vmax.xlane.f32.xlu0 %v478
  %v522 = vpop.xlane.xlu0 %521
  %523 = vmax.xlane.f32.xlu0 %v479
  %v524 = vpop.xlane.xlu0 %523
  %525 = vmax.xlane.f32.xlu0 %v480
  %v526 = vpop.xlane.xlu0 %525
  %527 = vmax.xlane.f32.xlu0 %v481
  %v528 = vpop.xlane.xlu0 %527
  %529 = vmax.xlane.f32.xlu0 %v482
  %v530 = vpop.xlane.xlu0 %529
  %v531 = vmax.f32 %v483, %v500
  %v532 = vmax.f32 %v484, %v502
  %v533 = vmax.f32 %v485, %v504
  %v534 = vmax.f32 %v486, %v506
  %v535 = vmax.f32 %v487, %v508
  %v536 = vmax.f32 %v488, %v510
  %v537 = vmax.f32 %v489, %v512
  %v538 = vmax.f32 %v490, %v514
  %v539 = vmax.f32 %v491, %v516
  %v540 = vmax.f32 %v492, %v518
  %v541 = vmax.f32 %v493, %v520
  %v542 = vmax.f32 %v494, %v522
  %v543 = vmax.f32 %v495, %v524
  %v544 = vmax.f32 %v496, %v526
  %v545 = vmax.f32 %v497, %v528
  %v546 = vmax.f32 %v498, %v530
  %vm547 = vcmask 7168
  %548 = vst.msk [vmem:[#allocation2] sm:$0xff] %vm547, %v531
  %549 = vst.msk [vmem:[#allocation2 + $0x8] sm:$0xff] %vm547, %v532
  %550 = vst.msk [vmem:[#allocation2 + $0x10] sm:$0xff] %vm547, %v533
  %551 = vst.msk [vmem:[#allocation2 + $0x18] sm:$0xff] %vm547, %v534
  %552 = vst.msk [vmem:[#allocation2 + $0x20] sm:$0xff] %vm547, %v535
  %553 = vst.msk [vmem:[#allocation2 + $0x28] sm:$0xff] %vm547, %v536
  %554 = vst.msk [vmem:[#allocation2 + $0x30] sm:$0xff] %vm547, %v537
  %555 = vst.msk [vmem:[#allocation2 + $0x38] sm:$0xff] %vm547, %v538
  %556 = vst.msk [vmem:[#allocation2 + $0x40] sm:$0xff] %vm547, %v539
  %557 = vst.msk [vmem:[#allocation2 + $0x48] sm:$0xff] %vm547, %v540
  %558 = vst.msk [vmem:[#allocation2 + $0x50] sm:$0xff] %vm547, %v541
  %559 = vst.msk [vmem:[#allocation2 + $0x58] sm:$0xff] %vm547, %v542
  %560 = vst.msk [vmem:[#allocation2 + $0x60] sm:$0xff] %vm547, %v543
  %561 = vst.msk [vmem:[#allocation2 + $0x68] sm:$0xff] %vm547, %v544
  %562 = vst.msk [vmem:[#allocation2 + $0x70] sm:$0xff] %vm547, %v545
  %563 = vst.msk [vmem:[#allocation2 + $0x78] sm:$0xff] %vm547, %v546
  %v564 = vsel %vm364, 1e+30, %v279
  %v565 = vsel %vm365, 1e+30, %v280
  %v566 = vsel %vm366, 1e+30, %v281
  %v567 = vsel %vm367, 1e+30, %v282
  %v568 = vsel %vm368, 1e+30, %v283
  %v569 = vsel %vm369, 1e+30, %v284
  %v570 = vsel %vm370, 1e+30, %v285
  %v571 = vsel %vm371, 1e+30, %v286
  %v572 = vsel %vm372, 1e+30, %v287
  %v573 = vsel %vm373, 1e+30, %v288
  %v574 = vsel %vm374, 1e+30, %v289
  %v575 = vsel %vm375, 1e+30, %v290
  %v576 = vsel %vm376, 1e+30, %v291
  %v577 = vsel %vm377, 1e+30, %v292
  %v578 = vsel %vm378, 1e+30, %v293
  %v579 = vsel %vm379, 1e+30, %v294
  %v580 = vld [vmem:[%s6] sm:$0x1]
  %v582 = vlaneseq
  %v583 = vshrl.u32 %v582, 7
  %v584 = vsub.s32 0, %v583
  %v585 = vrot.slane %v580, %v584
  %v587 = vadd.f32 %v564, %v585
  %v588 = vadd.f32 %v565, %v585
  %v589 = vadd.f32 %v566, %v585
  %v590 = vadd.f32 %v567, %v585
  %v591 = vadd.f32 %v568, %v585
  %v592 = vadd.f32 %v569, %v585
  %v593 = vadd.f32 %v570, %v585
  %v594 = vadd.f32 %v571, %v585
  %v595 = vadd.f32 %v572, %v585
  %v596 = vadd.f32 %v573, %v585
  %v597 = vadd.f32 %v574, %v585
  %v598 = vadd.f32 %v575, %v585
  %v599 = vadd.f32 %v576, %v585
  %v600 = vadd.f32 %v577, %v585
  %v601 = vadd.f32 %v578, %v585
  %v602 = vadd.f32 %v579, %v585
  %v603 = vld [vmem:[#allocation3] sm:$0xff]
  %v604 = vld [vmem:[#allocation3 + $0x8] sm:$0xff]
  %v605 = vld [vmem:[#allocation3 + $0x10] sm:$0xff]
  %v606 = vld [vmem:[#allocation3 + $0x18] sm:$0xff]
  %v607 = vld [vmem:[#allocation3 + $0x20] sm:$0xff]
  %v608 = vld [vmem:[#allocation3 + $0x28] sm:$0xff]
  %v609 = vld [vmem:[#allocation3 + $0x30] sm:$0xff]
  %v610 = vld [vmem:[#allocation3 + $0x38] sm:$0xff]
  %v611 = vld [vmem:[#allocation3 + $0x40] sm:$0xff]
  %v612 = vld [vmem:[#allocation3 + $0x48] sm:$0xff]
  %v613 = vld [vmem:[#allocation3 + $0x50] sm:$0xff]
  %v614 = vld [vmem:[#allocation3 + $0x58] sm:$0xff]
  %v615 = vld [vmem:[#allocation3 + $0x60] sm:$0xff]
  %v616 = vld [vmem:[#allocation3 + $0x68] sm:$0xff]
  %v617 = vld [vmem:[#allocation3 + $0x70] sm:$0xff]
  %v618 = vld [vmem:[#allocation3 + $0x78] sm:$0xff]
  %619 = vmin.xlane.f32.xlu0 %v587
  %v620 = vpop.xlane.xlu0 %619
  %621 = vmin.xlane.f32.xlu0 %v588
  %v622 = vpop.xlane.xlu0 %621
  %623 = vmin.xlane.f32.xlu0 %v589
  %v624 = vpop.xlane.xlu0 %623
  %625 = vmin.xlane.f32.xlu0 %v590
  %v626 = vpop.xlane.xlu0 %625
  %627 = vmin.xlane.f32.xlu0 %v591
  %v628 = vpop.xlane.xlu0 %627
  %629 = vmin.xlane.f32.xlu0 %v592
  %v630 = vpop.xlane.xlu0 %629
  %631 = vmin.xlane.f32.xlu0 %v593
  %v632 = vpop.xlane.xlu0 %631
  %633 = vmin.xlane.f32.xlu0 %v594
  %v634 = vpop.xlane.xlu0 %633
  %635 = vmin.xlane.f32.xlu0 %v595
  %v636 = vpop.xlane.xlu0 %635
  %637 = vmin.xlane.f32.xlu0 %v596
  %v638 = vpop.xlane.xlu0 %637
  %639 = vmin.xlane.f32.xlu0 %v597
  %v640 = vpop.xlane.xlu0 %639
  %641 = vmin.xlane.f32.xlu0 %v598
  %v642 = vpop.xlane.xlu0 %641
  %643 = vmin.xlane.f32.xlu0 %v599
  %v644 = vpop.xlane.xlu0 %643
  %645 = vmin.xlane.f32.xlu0 %v600
  %v646 = vpop.xlane.xlu0 %645
  %647 = vmin.xlane.f32.xlu0 %v601
  %v648 = vpop.xlane.xlu0 %647
  %649 = vmin.xlane.f32.xlu0 %v602
  %v650 = vpop.xlane.xlu0 %649
  %v651 = vmin.f32 %v603, %v620
  %v652 = vmin.f32 %v604, %v622
  %v653 = vmin.f32 %v605, %v624
  %v654 = vmin.f32 %v606, %v626
  %v655 = vmin.f32 %v607, %v628
  %v656 = vmin.f32 %v608, %v630
  %v657 = vmin.f32 %v609, %v632
  %v658 = vmin.f32 %v610, %v634
  %v659 = vmin.f32 %v611, %v636
  %v660 = vmin.f32 %v612, %v638
  %v661 = vmin.f32 %v613, %v640
  %v662 = vmin.f32 %v614, %v642
  %v663 = vmin.f32 %v615, %v644
  %v664 = vmin.f32 %v616, %v646
  %v665 = vmin.f32 %v617, %v648
  %v666 = vmin.f32 %v618, %v650
  %667 = vst.msk [vmem:[#allocation3] sm:$0xff] %vm547, %v651
  %668 = vst.msk [vmem:[#allocation3 + $0x8] sm:$0xff] %vm547, %v652
  %669 = vst.msk [vmem:[#allocation3 + $0x10] sm:$0xff] %vm547, %v653
  %670 = vst.msk [vmem:[#allocation3 + $0x18] sm:$0xff] %vm547, %v654
  %671 = vst.msk [vmem:[#allocation3 + $0x20] sm:$0xff] %vm547, %v655
  %672 = vst.msk [vmem:[#allocation3 + $0x28] sm:$0xff] %vm547, %v656
  %673 = vst.msk [vmem:[#allocation3 + $0x30] sm:$0xff] %vm547, %v657
  %674 = vst.msk [vmem:[#allocation3 + $0x38] sm:$0xff] %vm547, %v658
  %675 = vst.msk [vmem:[#allocation3 + $0x40] sm:$0xff] %vm547, %v659
  %676 = vst.msk [vmem:[#allocation3 + $0x48] sm:$0xff] %vm547, %v660
  %677 = vst.msk [vmem:[#allocation3 + $0x50] sm:$0xff] %vm547, %v661
  %678 = vst.msk [vmem:[#allocation3 + $0x58] sm:$0xff] %vm547, %v662
  %679 = vst.msk [vmem:[#allocation3 + $0x60] sm:$0xff] %vm547, %v663
  %680 = vst.msk [vmem:[#allocation3 + $0x68] sm:$0xff] %vm547, %v664
  %681 = vst.msk [vmem:[#allocation3 + $0x70] sm:$0xff] %vm547, %v665
  %682 = vst.msk [vmem:[#allocation3 + $0x78] sm:$0xff] %vm547, %v666
  %v683 = vld [vmem:[#allocation4] sm:$0xff]
  %v684 = vld [vmem:[#allocation4 + $0x8] sm:$0xff]
  %v685 = vld [vmem:[#allocation4 + $0x10] sm:$0xff]
  %v686 = vld [vmem:[#allocation4 + $0x18] sm:$0xff]
  %v687 = vld [vmem:[#allocation4 + $0x20] sm:$0xff]
  %v688 = vld [vmem:[#allocation4 + $0x28] sm:$0xff]
  %v689 = vld [vmem:[#allocation4 + $0x30] sm:$0xff]
  %v690 = vld [vmem:[#allocation4 + $0x38] sm:$0xff]
  %v691 = vld [vmem:[#allocation4 + $0x40] sm:$0xff]
  %v692 = vld [vmem:[#allocation4 + $0x48] sm:$0xff]
  %v693 = vld [vmem:[#allocation4 + $0x50] sm:$0xff]
  %v694 = vld [vmem:[#allocation4 + $0x58] sm:$0xff]
  %v695 = vld [vmem:[#allocation4 + $0x60] sm:$0xff]
  %v696 = vld [vmem:[#allocation4 + $0x68] sm:$0xff]
  %v697 = vld [vmem:[#allocation4 + $0x70] sm:$0xff]
  %v698 = vld [vmem:[#allocation4 + $0x78] sm:$0xff]
  %699 = vmax.xlane.f32.xlu0 %v279
  %v700 = vpop.xlane.xlu0 %699
  %701 = vmax.xlane.f32.xlu0 %v280
  %v702 = vpop.xlane.xlu0 %701
  %703 = vmax.xlane.f32.xlu0 %v281
  %v704 = vpop.xlane.xlu0 %703
  %705 = vmax.xlane.f32.xlu0 %v282
  %v706 = vpop.xlane.xlu0 %705
  %707 = vmax.xlane.f32.xlu0 %v283
  %v708 = vpop.xlane.xlu0 %707
  %709 = vmax.xlane.f32.xlu0 %v284
  %v710 = vpop.xlane.xlu0 %709
  %711 = vmax.xlane.f32.xlu0 %v285
  %v712 = vpop.xlane.xlu0 %711
  %713 = vmax.xlane.f32.xlu0 %v286
  %v714 = vpop.xlane.xlu0 %713
  %715 = vmax.xlane.f32.xlu0 %v287
  %v716 = vpop.xlane.xlu0 %715
  %717 = vmax.xlane.f32.xlu0 %v288
  %v718 = vpop.xlane.xlu0 %717
  %719 = vmax.xlane.f32.xlu0 %v289
  %v720 = vpop.xlane.xlu0 %719
  %721 = vmax.xlane.f32.xlu0 %v290
  %v722 = vpop.xlane.xlu0 %721
  %723 = vmax.xlane.f32.xlu0 %v291
  %v724 = vpop.xlane.xlu0 %723
  %725 = vmax.xlane.f32.xlu0 %v292
  %v726 = vpop.xlane.xlu0 %725
  %727 = vmax.xlane.f32.xlu0 %v293
  %v728 = vpop.xlane.xlu0 %727
  %729 = vmax.xlane.f32.xlu0 %v294
  %v730 = vpop.xlane.xlu0 %729
  %v731 = vmax.f32 %v683, %v700
  %v732 = vmax.f32 %v684, %v702
  %v733 = vmax.f32 %v685, %v704
  %v734 = vmax.f32 %v686, %v706
  %v735 = vmax.f32 %v687, %v708
  %v736 = vmax.f32 %v688, %v710
  %v737 = vmax.f32 %v689, %v712
  %v738 = vmax.f32 %v690, %v714
  %v739 = vmax.f32 %v691, %v716
  %v740 = vmax.f32 %v692, %v718
  %v741 = vmax.f32 %v693, %v720
  %v742 = vmax.f32 %v694, %v722
  %v743 = vmax.f32 %v695, %v724
  %v744 = vmax.f32 %v696, %v726
  %v745 = vmax.f32 %v697, %v728
  %v746 = vmax.f32 %v698, %v730
  %747 = vst.msk [vmem:[#allocation4] sm:$0xff] %vm547, %v731
  %748 = vst.msk [vmem:[#allocation4 + $0x8] sm:$0xff] %vm547, %v732
  %749 = vst.msk [vmem:[#allocation4 + $0x10] sm:$0xff] %vm547, %v733
  %750 = vst.msk [vmem:[#allocation4 + $0x18] sm:$0xff] %vm547, %v734
  %751 = vst.msk [vmem:[#allocation4 + $0x20] sm:$0xff] %vm547, %v735
  %752 = vst.msk [vmem:[#allocation4 + $0x28] sm:$0xff] %vm547, %v736
  %753 = vst.msk [vmem:[#allocation4 + $0x30] sm:$0xff] %vm547, %v737
  %754 = vst.msk [vmem:[#allocation4 + $0x38] sm:$0xff] %vm547, %v738
  %755 = vst.msk [vmem:[#allocation4 + $0x40] sm:$0xff] %vm547, %v739
  %756 = vst.msk [vmem:[#allocation4 + $0x48] sm:$0xff] %vm547, %v740
  %757 = vst.msk [vmem:[#allocation4 + $0x50] sm:$0xff] %vm547, %v741
  %758 = vst.msk [vmem:[#allocation4 + $0x58] sm:$0xff] %vm547, %v742
  %759 = vst.msk [vmem:[#allocation4 + $0x60] sm:$0xff] %vm547, %v743
  %760 = vst.msk [vmem:[#allocation4 + $0x68] sm:$0xff] %vm547, %v744
  %761 = vst.msk [vmem:[#allocation4 + $0x70] sm:$0xff] %vm547, %v745
  %762 = vst.msk [vmem:[#allocation4 + $0x78] sm:$0xff] %vm547, %v746
  // Predicated region
  $region34: #{batch_hard_triplet_loss.1} parent=0 // pred_check
    %p763 = pneg %p26
  $region35: #{batch_hard_triplet_loss.1} parent=0 // pred_check_branch
    %765 = sbr.rel (%p763) target = $region37
  $region36: #{batch_hard_triplet_loss.1} parent=0 // pred_region
    %v766 = vld [vmem:[%s4] sm:$0xff]
    %v767 = vld [vmem:[%s4 + $0x8] sm:$0xff]
    %v768 = vld [vmem:[%s4 + $0x10] sm:$0xff]
    %v769 = vld [vmem:[%s4 + $0x18] sm:$0xff]
    %v770 = vld [vmem:[%s4 + $0x20] sm:$0xff]
    %v771 = vld [vmem:[%s4 + $0x28] sm:$0xff]
    %v772 = vld [vmem:[%s4 + $0x30] sm:$0xff]
    %v773 = vld [vmem:[%s4 + $0x38] sm:$0xff]
    %v774 = vld [vmem:[%s4 + $0x40] sm:$0xff]
    %v775 = vld [vmem:[%s4 + $0x48] sm:$0xff]
    %v776 = vld [vmem:[%s4 + $0x50] sm:$0xff]
    %v777 = vld [vmem:[%s4 + $0x58] sm:$0xff]
    %v778 = vld [vmem:[%s4 + $0x60] sm:$0xff]
    %v779 = vld [vmem:[%s4 + $0x68] sm:$0xff]
    %v780 = vld [vmem:[%s4 + $0x70] sm:$0xff]
    %v781 = vld [vmem:[%s4 + $0x78] sm:$0xff]
    %v782 = vld [vmem:[#allocation2] sm:$0xff]
    %v783 = vld [vmem:[#allocation2 + $0x8] sm:$0xff]
    %v784 = vld [vmem:[#allocation2 + $0x10] sm:$0xff]
    %v785 = vld [vmem:[#allocation2 + $0x18] sm:$0xff]
    %v786 = vld [vmem:[#allocation2 + $0x20] sm:$0xff]
    %v787 = vld [vmem:[#allocation2 + $0x28] sm:$0xff]
    %v788 = vld [vmem:[#allocation2 + $0x30] sm:$0xff]
    %v789 = vld [vmem:[#allocation2 + $0x38] sm:$0xff]
    %v790 = vld [vmem:[#allocation2 + $0x40] sm:$0xff]
    %v791 = vld [vmem:[#allocation2 + $0x48] sm:$0xff]
    %v792 = vld [vmem:[#allocation2 + $0x50] sm:$0xff]
    %v793 = vld [vmem:[#allocation2 + $0x58] sm:$0xff]
    %v794 = vld [vmem:[#allocation2 + $0x60] sm:$0xff]
    %v795 = vld [vmem:[#allocation2 + $0x68] sm:$0xff]
    %v796 = vld [vmem:[#allocation2 + $0x70] sm:$0xff]
    %v797 = vld [vmem:[#allocation2 + $0x78] sm:$0xff]
    %v798 = vadd.f32 %v782, %v766
    %v799 = vadd.f32 %v783, %v767
    %v800 = vadd.f32 %v784, %v768
    %v801 = vadd.f32 %v785, %v769
    %v802 = vadd.f32 %v786, %v770
    %v803 = vadd.f32 %v787, %v771
    %v804 = vadd.f32 %v788, %v772
    %v805 = vadd.f32 %v789, %v773
    %v806 = vadd.f32 %v790, %v774
    %v807 = vadd.f32 %v791, %v775
    %v808 = vadd.f32 %v792, %v776
    %v809 = vadd.f32 %v793, %v777
    %v810 = vadd.f32 %v794, %v778
    %v811 = vadd.f32 %v795, %v779
    %v812 = vadd.f32 %v796, %v780
    %v813 = vadd.f32 %v797, %v781
    %v814 = vmax.f32 %v798, 0.0
    %v815 = vmax.f32 %v799, 0.0
    %v816 = vmax.f32 %v800, 0.0
    %v817 = vmax.f32 %v801, 0.0
    %v818 = vmax.f32 %v802, 0.0
    %v819 = vmax.f32 %v803, 0.0
    %v820 = vmax.f32 %v804, 0.0
    %v821 = vmax.f32 %v805, 0.0
    %v822 = vmax.f32 %v806, 0.0
    %v823 = vmax.f32 %v807, 0.0
    %v824 = vmax.f32 %v808, 0.0
    %v825 = vmax.f32 %v809, 0.0
    %v826 = vmax.f32 %v810, 0.0
    %v827 = vmax.f32 %v811, 0.0
    %v828 = vmax.f32 %v812, 0.0
    %v829 = vmax.f32 %v813, 0.0
    %v830 = vld [vmem:[#allocation3] sm:$0xff]
    %v831 = vld [vmem:[#allocation3 + $0x8] sm:$0xff]
    %v832 = vld [vmem:[#allocation3 + $0x10] sm:$0xff]
    %v833 = vld [vmem:[#allocation3 + $0x18] sm:$0xff]
    %v834 = vld [vmem:[#allocation3 + $0x20] sm:$0xff]
    %v835 = vld [vmem:[#allocation3 + $0x28] sm:$0xff]
    %v836 = vld [vmem:[#allocation3 + $0x30] sm:$0xff]
    %v837 = vld [vmem:[#allocation3 + $0x38] sm:$0xff]
    %v838 = vld [vmem:[#allocation3 + $0x40] sm:$0xff]
    %v839 = vld [vmem:[#allocation3 + $0x48] sm:$0xff]
    %v840 = vld [vmem:[#allocation3 + $0x50] sm:$0xff]
    %v841 = vld [vmem:[#allocation3 + $0x58] sm:$0xff]
    %v842 = vld [vmem:[#allocation3 + $0x60] sm:$0xff]
    %v843 = vld [vmem:[#allocation3 + $0x68] sm:$0xff]
    %v844 = vld [vmem:[#allocation3 + $0x70] sm:$0xff]
    %v845 = vld [vmem:[#allocation3 + $0x78] sm:$0xff]
    %v846 = vld [vmem:[#allocation4] sm:$0xff]
    %v847 = vld [vmem:[#allocation4 + $0x8] sm:$0xff]
    %v848 = vld [vmem:[#allocation4 + $0x10] sm:$0xff]
    %v849 = vld [vmem:[#allocation4 + $0x18] sm:$0xff]
    %v850 = vld [vmem:[#allocation4 + $0x20] sm:$0xff]
    %v851 = vld [vmem:[#allocation4 + $0x28] sm:$0xff]
    %v852 = vld [vmem:[#allocation4 + $0x30] sm:$0xff]
    %v853 = vld [vmem:[#allocation4 + $0x38] sm:$0xff]
    %v854 = vld [vmem:[#allocation4 + $0x40] sm:$0xff]
    %v855 = vld [vmem:[#allocation4 + $0x48] sm:$0xff]
    %v856 = vld [vmem:[#allocation4 + $0x50] sm:$0xff]
    %v857 = vld [vmem:[#allocation4 + $0x58] sm:$0xff]
    %v858 = vld [vmem:[#allocation4 + $0x60] sm:$0xff]
    %v859 = vld [vmem:[#allocation4 + $0x68] sm:$0xff]
    %v860 = vld [vmem:[#allocation4 + $0x70] sm:$0xff]
    %v861 = vld [vmem:[#allocation4 + $0x78] sm:$0xff]
    %v862 = vmin.f32 %v830, %v846
    %v863 = vmin.f32 %v831, %v847
    %v864 = vmin.f32 %v832, %v848
    %v865 = vmin.f32 %v833, %v849
    %v866 = vmin.f32 %v834, %v850
    %v867 = vmin.f32 %v835, %v851
    %v868 = vmin.f32 %v836, %v852
    %v869 = vmin.f32 %v837, %v853
    %v870 = vmin.f32 %v838, %v854
    %v871 = vmin.f32 %v839, %v855
    %v872 = vmin.f32 %v840, %v856
    %v873 = vmin.f32 %v841, %v857
    %v874 = vmin.f32 %v842, %v858
    %v875 = vmin.f32 %v843, %v859
    %v876 = vmin.f32 %v844, %v860
    %v877 = vmin.f32 %v845, %v861
    %v878 = vadd.f32 %v862, %v766
    %v879 = vadd.f32 %v863, %v767
    %v880 = vadd.f32 %v864, %v768
    %v881 = vadd.f32 %v865, %v769
    %v882 = vadd.f32 %v866, %v770
    %v883 = vadd.f32 %v867, %v771
    %v884 = vadd.f32 %v868, %v772
    %v885 = vadd.f32 %v869, %v773
    %v886 = vadd.f32 %v870, %v774
    %v887 = vadd.f32 %v871, %v775
    %v888 = vadd.f32 %v872, %v776
    %v889 = vadd.f32 %v873, %v777
    %v890 = vadd.f32 %v874, %v778
    %v891 = vadd.f32 %v875, %v779
    %v892 = vadd.f32 %v876, %v780
    %v893 = vadd.f32 %v877, %v781
    %v894 = vmax.f32 %v878, 0.0
    %v895 = vmax.f32 %v879, 0.0
    %v896 = vmax.f32 %v880, 0.0
    %v897 = vmax.f32 %v881, 0.0
    %v898 = vmax.f32 %v882, 0.0
    %v899 = vmax.f32 %v883, 0.0
    %v900 = vmax.f32 %v884, 0.0
    %v901 = vmax.f32 %v885, 0.0
    %v902 = vmax.f32 %v886, 0.0
    %v903 = vmax.f32 %v887, 0.0
    %v904 = vmax.f32 %v888, 0.0
    %v905 = vmax.f32 %v889, 0.0
    %v906 = vmax.f32 %v890, 0.0
    %v907 = vmax.f32 %v891, 0.0
    %v908 = vmax.f32 %v892, 0.0
    %v909 = vmax.f32 %v893, 0.0
    %vm910 = vcmp.eq.f32.partialorder %v814, 0.0
    %vm911 = vcmp.eq.f32.partialorder %v815, 0.0
    %vm912 = vcmp.eq.f32.partialorder %v816, 0.0
    %vm913 = vcmp.eq.f32.partialorder %v817, 0.0
    %vm914 = vcmp.eq.f32.partialorder %v818, 0.0
    %vm915 = vcmp.eq.f32.partialorder %v819, 0.0
    %vm916 = vcmp.eq.f32.partialorder %v820, 0.0
    %vm917 = vcmp.eq.f32.partialorder %v821, 0.0
    %vm918 = vcmp.eq.f32.partialorder %v822, 0.0
    %vm919 = vcmp.eq.f32.partialorder %v823, 0.0
    %vm920 = vcmp.eq.f32.partialorder %v824, 0.0
    %vm921 = vcmp.eq.f32.partialorder %v825, 0.0
    %vm922 = vcmp.eq.f32.partialorder %v826, 0.0
    %vm923 = vcmp.eq.f32.partialorder %v827, 0.0
    %vm924 = vcmp.eq.f32.partialorder %v828, 0.0
    %vm925 = vcmp.eq.f32.partialorder %v829, 0.0
    %v926 = vsel %vm910, 1, 0
    %v927 = vsel %vm911, 1, 0
    %v928 = vsel %vm912, 1, 0
    %v929 = vsel %vm913, 1, 0
    %v930 = vsel %vm914, 1, 0
    %v931 = vsel %vm915, 1, 0
    %v932 = vsel %vm916, 1, 0
    %v933 = vsel %vm917, 1, 0
    %v934 = vsel %vm918, 1, 0
    %v935 = vsel %vm919, 1, 0
    %v936 = vsel %vm920, 1, 0
    %v937 = vsel %vm921, 1, 0
    %v938 = vsel %vm922, 1, 0
    %v939 = vsel %vm923, 1, 0
    %v940 = vsel %vm924, 1, 0
    %v941 = vsel %vm925, 1, 0
    %v942 = vcvt.s32.f32 %v926
    %v943 = vcvt.s32.f32 %v927
    %v944 = vcvt.s32.f32 %v928
    %v945 = vcvt.s32.f32 %v929
    %v946 = vcvt.s32.f32 %v930
    %v947 = vcvt.s32.f32 %v931
    %v948 = vcvt.s32.f32 %v932
    %v949 = vcvt.s32.f32 %v933
    %v950 = vcvt.s32.f32 %v934
    %v951 = vcvt.s32.f32 %v935
    %v952 = vcvt.s32.f32 %v936
    %v953 = vcvt.s32.f32 %v937
    %v954 = vcvt.s32.f32 %v938
    %v955 = vcvt.s32.f32 %v939
    %v956 = vcvt.s32.f32 %v940
    %v957 = vcvt.s32.f32 %v941
    %v958 = vsub.f32 1.0, %v942
    %v959 = vsub.f32 1.0, %v943
    %v960 = vsub.f32 1.0, %v944
    %v961 = vsub.f32 1.0, %v945
    %v962 = vsub.f32 1.0, %v946
    %v963 = vsub.f32 1.0, %v947
    %v964 = vsub.f32 1.0, %v948
    %v965 = vsub.f32 1.0, %v949
    %v966 = vsub.f32 1.0, %v950
    %v967 = vsub.f32 1.0, %v951
    %v968 = vsub.f32 1.0, %v952
    %v969 = vsub.f32 1.0, %v953
    %v970 = vsub.f32 1.0, %v954
    %v971 = vsub.f32 1.0, %v955
    %v972 = vsub.f32 1.0, %v956
    %v973 = vsub.f32 1.0, %v957
    %v974 = vmul.f32 %v942, 1e-16
    %v975 = vmul.f32 %v943, 1e-16
    %v976 = vmul.f32 %v944, 1e-16
    %v977 = vmul.f32 %v945, 1e-16
    %v978 = vmul.f32 %v946, 1e-16
    %v979 = vmul.f32 %v947, 1e-16
    %v980 = vmul.f32 %v948, 1e-16
    %v981 = vmul.f32 %v949, 1e-16
    %v982 = vmul.f32 %v950, 1e-16
    %v983 = vmul.f32 %v951, 1e-16
    %v984 = vmul.f32 %v952, 1e-16
    %v985 = vmul.f32 %v953, 1e-16
    %v986 = vmul.f32 %v954, 1e-16
    %v987 = vmul.f32 %v955, 1e-16
    %v988 = vmul.f32 %v956, 1e-16
    %v989 = vmul.f32 %v957, 1e-16
    %v990 = vadd.f32 %v814, %v974
    %v991 = vadd.f32 %v815, %v975
    %v992 = vadd.f32 %v816, %v976
    %v993 = vadd.f32 %v817, %v977
    %v994 = vadd.f32 %v818, %v978
    %v995 = vadd.f32 %v819, %v979
    %v996 = vadd.f32 %v820, %v980
    %v997 = vadd.f32 %v821, %v981
    %v998 = vadd.f32 %v822, %v982
    %v999 = vadd.f32 %v823, %v983
    %v1000 = vadd.f32 %v824, %v984
    %v1001 = vadd.f32 %v825, %v985
    %v1002 = vadd.f32 %v826, %v986
    %v1003 = vadd.f32 %v827, %v987
    %v1004 = vadd.f32 %v828, %v988
    %v1005 = vadd.f32 %v829, %v989
    %v1006 = vrsqrt.pop %v990
    %v1007 = vmul.f32 %v990, %v1006
    %vm1008 = vcmp.eq.f32.partialorder %v990, inf
    %v1009 = vsel %vm1008, %v990, %v1007
    %vm1010 = vcmp.eq.f32.partialorder %v990, 0.0
    %v1011 = vand.u32 %v990, 2147483648
    %v1012 = vsel %vm1010, %v1011, %v1009
    %v1013 = vrsqrt.pop %v991
    %v1014 = vmul.f32 %v991, %v1013
    %vm1015 = vcmp.eq.f32.partialorder %v991, inf
    %v1016 = vsel %vm1015, %v991, %v1014
    %vm1017 = vcmp.eq.f32.partialorder %v991, 0.0
    %v1018 = vand.u32 %v991, 2147483648
    %v1019 = vsel %vm1017, %v1018, %v1016
    %v1020 = vrsqrt.pop %v992
    %v1021 = vmul.f32 %v992, %v1020
    %vm1022 = vcmp.eq.f32.partialorder %v992, inf
    %v1023 = vsel %vm1022, %v992, %v1021
    %vm1024 = vcmp.eq.f32.partialorder %v992, 0.0
    %v1025 = vand.u32 %v992, 2147483648
    %v1026 = vsel %vm1024, %v1025, %v1023
    %v1027 = vrsqrt.pop %v993
    %v1028 = vmul.f32 %v993, %v1027
    %vm1029 = vcmp.eq.f32.partialorder %v993, inf
    %v1030 = vsel %vm1029, %v993, %v1028
    %vm1031 = vcmp.eq.f32.partialorder %v993, 0.0
    %v1032 = vand.u32 %v993, 2147483648
    %v1033 = vsel %vm1031, %v1032, %v1030
    %v1034 = vrsqrt.pop %v994
    %v1035 = vmul.f32 %v994, %v1034
    %vm1036 = vcmp.eq.f32.partialorder %v994, inf
    %v1037 = vsel %vm1036, %v994, %v1035
    %vm1038 = vcmp.eq.f32.partialorder %v994, 0.0
    %v1039 = vand.u32 %v994, 2147483648
    %v1040 = vsel %vm1038, %v1039, %v1037
    %v1041 = vrsqrt.pop %v995
    %v1042 = vmul.f32 %v995, %v1041
    %vm1043 = vcmp.eq.f32.partialorder %v995, inf
    %v1044 = vsel %vm1043, %v995, %v1042
    %vm1045 = vcmp.eq.f32.partialorder %v995, 0.0
    %v1046 = vand.u32 %v995, 2147483648
    %v1047 = vsel %vm1045, %v1046, %v1044
    %v1048 = vrsqrt.pop %v996
    %v1049 = vmul.f32 %v996, %v1048
    %vm1050 = vcmp.eq.f32.partialorder %v996, inf
    %v1051 = vsel %vm1050, %v996, %v1049
    %vm1052 = vcmp.eq.f32.partialorder %v996, 0.0
    %v1053 = vand.u32 %v996, 2147483648
    %v1054 = vsel %vm1052, %v1053, %v1051
    %v1055 = vrsqrt.pop %v997
    %v1056 = vmul.f32 %v997, %v1055
    %vm1057 = vcmp.eq.f32.partialorder %v997, inf
    %v1058 = vsel %vm1057, %v997, %v1056
    %vm1059 = vcmp.eq.f32.partialorder %v997, 0.0
    %v1060 = vand.u32 %v997, 2147483648
    %v1061 = vsel %vm1059, %v1060, %v1058
    %v1062 = vrsqrt.pop %v998
    %v1063 = vmul.f32 %v998, %v1062
    %vm1064 = vcmp.eq.f32.partialorder %v998, inf
    %v1065 = vsel %vm1064, %v998, %v1063
    %vm1066 = vcmp.eq.f32.partialorder %v998, 0.0
    %v1067 = vand.u32 %v998, 2147483648
    %v1068 = vsel %vm1066, %v1067, %v1065
    %v1069 = vrsqrt.pop %v999
    %v1070 = vmul.f32 %v999, %v1069
    %vm1071 = vcmp.eq.f32.partialorder %v999, inf
    %v1072 = vsel %vm1071, %v999, %v1070
    %vm1073 = vcmp.eq.f32.partialorder %v999, 0.0
    %v1074 = vand.u32 %v999, 2147483648
    %v1075 = vsel %vm1073, %v1074, %v1072
    %v1076 = vrsqrt.pop %v1000
    %v1077 = vmul.f32 %v1000, %v1076
    %vm1078 = vcmp.eq.f32.partialorder %v1000, inf
    %v1079 = vsel %vm1078, %v1000, %v1077
    %vm1080 = vcmp.eq.f32.partialorder %v1000, 0.0
    %v1081 = vand.u32 %v1000, 2147483648
    %v1082 = vsel %vm1080, %v1081, %v1079
    %v1083 = vrsqrt.pop %v1001
    %v1084 = vmul.f32 %v1001, %v1083
    %vm1085 = vcmp.eq.f32.partialorder %v1001, inf
    %v1086 = vsel %vm1085, %v1001, %v1084
    %vm1087 = vcmp.eq.f32.partialorder %v1001, 0.0
    %v1088 = vand.u32 %v1001, 2147483648
    %v1089 = vsel %vm1087, %v1088, %v1086
    %v1090 = vrsqrt.pop %v1002
    %v1091 = vmul.f32 %v1002, %v1090
    %vm1092 = vcmp.eq.f32.partialorder %v1002, inf
    %v1093 = vsel %vm1092, %v1002, %v1091
    %vm1094 = vcmp.eq.f32.partialorder %v1002, 0.0
    %v1095 = vand.u32 %v1002, 2147483648
    %v1096 = vsel %vm1094, %v1095, %v1093
    %v1097 = vrsqrt.pop %v1003
    %v1098 = vmul.f32 %v1003, %v1097
    %vm1099 = vcmp.eq.f32.partialorder %v1003, inf
    %v1100 = vsel %vm1099, %v1003, %v1098
    %vm1101 = vcmp.eq.f32.partialorder %v1003, 0.0
    %v1102 = vand.u32 %v1003, 2147483648
    %v1103 = vsel %vm1101, %v1102, %v1100
    %v1104 = vrsqrt.pop %v1004
    %v1105 = vmul.f32 %v1004, %v1104
    %vm1106 = vcmp.eq.f32.partialorder %v1004, inf
    %v1107 = vsel %vm1106, %v1004, %v1105
    %vm1108 = vcmp.eq.f32.partialorder %v1004, 0.0
    %v1109 = vand.u32 %v1004, 2147483648
    %v1110 = vsel %vm1108, %v1109, %v1107
    %v1111 = vrsqrt.pop %v1005
    %v1112 = vmul.f32 %v1005, %v1111
    %vm1113 = vcmp.eq.f32.partialorder %v1005, inf
    %v1114 = vsel %vm1113, %v1005, %v1112
    %vm1115 = vcmp.eq.f32.partialorder %v1005, 0.0
    %v1116 = vand.u32 %v1005, 2147483648
    %v1117 = vsel %vm1115, %v1116, %v1114
    %v1118 = vmul.f32 %v958, %v1012
    %v1119 = vmul.f32 %v959, %v1019
    %v1120 = vmul.f32 %v960, %v1026
    %v1121 = vmul.f32 %v961, %v1033
    %v1122 = vmul.f32 %v962, %v1040
    %v1123 = vmul.f32 %v963, %v1047
    %v1124 = vmul.f32 %v964, %v1054
    %v1125 = vmul.f32 %v965, %v1061
    %v1126 = vmul.f32 %v966, %v1068
    %v1127 = vmul.f32 %v967, %v1075
    %v1128 = vmul.f32 %v968, %v1082
    %v1129 = vmul.f32 %v969, %v1089
    %v1130 = vmul.f32 %v970, %v1096
    %v1131 = vmul.f32 %v971, %v1103
    %v1132 = vmul.f32 %v972, %v1110
    %v1133 = vmul.f32 %v973, %v1117
    %vm1134 = vcmp.eq.f32.partialorder %v894, 0.0
    %vm1135 = vcmp.eq.f32.partialorder %v895, 0.0
    %vm1136 = vcmp.eq.f32.partialorder %v896, 0.0
    %vm1137 = vcmp.eq.f32.partialorder %v897, 0.0
    %vm1138 = vcmp.eq.f32.partialorder %v898, 0.0
    %vm1139 = vcmp.eq.f32.partialorder %v899, 0.0
    %vm1140 = vcmp.eq.f32.partialorder %v900, 0.0
    %vm1141 = vcmp.eq.f32.partialorder %v901, 0.0
    %vm1142 = vcmp.eq.f32.partialorder %v902, 0.0
    %vm1143 = vcmp.eq.f32.partialorder %v903, 0.0
    %vm1144 = vcmp.eq.f32.partialorder %v904, 0.0
    %vm1145 = vcmp.eq.f32.partialorder %v905, 0.0
    %vm1146 = vcmp.eq.f32.partialorder %v906, 0.0
    %vm1147 = vcmp.eq.f32.partialorder %v907, 0.0
    %vm1148 = vcmp.eq.f32.partialorder %v908, 0.0
    %vm1149 = vcmp.eq.f32.partialorder %v909, 0.0
    %v1150 = vsel %vm1134, 1, 0
    %v1151 = vsel %vm1135, 1, 0
    %v1152 = vsel %vm1136, 1, 0
    %v1153 = vsel %vm1137, 1, 0
    %v1154 = vsel %vm1138, 1, 0
    %v1155 = vsel %vm1139, 1, 0
    %v1156 = vsel %vm1140, 1, 0
    %v1157 = vsel %vm1141, 1, 0
    %v1158 = vsel %vm1142, 1, 0
    %v1159 = vsel %vm1143, 1, 0
    %v1160 = vsel %vm1144, 1, 0
    %v1161 = vsel %vm1145, 1, 0
    %v1162 = vsel %vm1146, 1, 0
    %v1163 = vsel %vm1147, 1, 0
    %v1164 = vsel %vm1148, 1, 0
    %v1165 = vsel %vm1149, 1, 0
    %v1166 = vcvt.s32.f32 %v1150
    %v1167 = vcvt.s32.f32 %v1151
    %v1168 = vcvt.s32.f32 %v1152
    %v1169 = vcvt.s32.f32 %v1153
    %v1170 = vcvt.s32.f32 %v1154
    %v1171 = vcvt.s32.f32 %v1155
    %v1172 = vcvt.s32.f32 %v1156
    %v1173 = vcvt.s32.f32 %v1157
    %v1174 = vcvt.s32.f32 %v1158
    %v1175 = vcvt.s32.f32 %v1159
    %v1176 = vcvt.s32.f32 %v1160
    %v1177 = vcvt.s32.f32 %v1161
    %v1178 = vcvt.s32.f32 %v1162
    %v1179 = vcvt.s32.f32 %v1163
    %v1180 = vcvt.s32.f32 %v1164
    %v1181 = vcvt.s32.f32 %v1165
    %v1182 = vsub.f32 1.0, %v1166
    %v1183 = vsub.f32 1.0, %v1167
    %v1184 = vsub.f32 1.0, %v1168
    %v1185 = vsub.f32 1.0, %v1169
    %v1186 = vsub.f32 1.0, %v1170
    %v1187 = vsub.f32 1.0, %v1171
    %v1188 = vsub.f32 1.0, %v1172
    %v1189 = vsub.f32 1.0, %v1173
    %v1190 = vsub.f32 1.0, %v1174
    %v1191 = vsub.f32 1.0, %v1175
    %v1192 = vsub.f32 1.0, %v1176
    %v1193 = vsub.f32 1.0, %v1177
    %v1194 = vsub.f32 1.0, %v1178
    %v1195 = vsub.f32 1.0, %v1179
    %v1196 = vsub.f32 1.0, %v1180
    %v1197 = vsub.f32 1.0, %v1181
    %v1198 = vmul.f32 %v1166, 1e-16
    %v1199 = vmul.f32 %v1167, 1e-16
    %v1200 = vmul.f32 %v1168, 1e-16
    %v1201 = vmul.f32 %v1169, 1e-16
    %v1202 = vmul.f32 %v1170, 1e-16
    %v1203 = vmul.f32 %v1171, 1e-16
    %v1204 = vmul.f32 %v1172, 1e-16
    %v1205 = vmul.f32 %v1173, 1e-16
    %v1206 = vmul.f32 %v1174, 1e-16
    %v1207 = vmul.f32 %v1175, 1e-16
    %v1208 = vmul.f32 %v1176, 1e-16
    %v1209 = vmul.f32 %v1177, 1e-16
    %v1210 = vmul.f32 %v1178, 1e-16
    %v1211 = vmul.f32 %v1179, 1e-16
    %v1212 = vmul.f32 %v1180, 1e-16
    %v1213 = vmul.f32 %v1181, 1e-16
    %v1214 = vadd.f32 %v894, %v1198
    %v1215 = vadd.f32 %v895, %v1199
    %v1216 = vadd.f32 %v896, %v1200
    %v1217 = vadd.f32 %v897, %v1201
    %v1218 = vadd.f32 %v898, %v1202
    %v1219 = vadd.f32 %v899, %v1203
    %v1220 = vadd.f32 %v900, %v1204
    %v1221 = vadd.f32 %v901, %v1205
    %v1222 = vadd.f32 %v902, %v1206
    %v1223 = vadd.f32 %v903, %v1207
    %v1224 = vadd.f32 %v904, %v1208
    %v1225 = vadd.f32 %v905, %v1209
    %v1226 = vadd.f32 %v906, %v1210
    %v1227 = vadd.f32 %v907, %v1211
    %v1228 = vadd.f32 %v908, %v1212
    %v1229 = vadd.f32 %v909, %v1213
    %v1230 = vrsqrt.pop %v1214
    %v1231 = vmul.f32 %v1214, %v1230
    %vm1232 = vcmp.eq.f32.partialorder %v1214, inf
    %v1233 = vsel %vm1232, %v1214, %v1231
    %vm1234 = vcmp.eq.f32.partialorder %v1214, 0.0
    %v1235 = vand.u32 %v1214, 2147483648
    %v1236 = vsel %vm1234, %v1235, %v1233
    %v1237 = vrsqrt.pop %v1215
    %v1238 = vmul.f32 %v1215, %v1237
    %vm1239 = vcmp.eq.f32.partialorder %v1215, inf
    %v1240 = vsel %vm1239, %v1215, %v1238
    %vm1241 = vcmp.eq.f32.partialorder %v1215, 0.0
    %v1242 = vand.u32 %v1215, 2147483648
    %v1243 = vsel %vm1241, %v1242, %v1240
    %v1244 = vrsqrt.pop %v1216
    %v1245 = vmul.f32 %v1216, %v1244
    %vm1246 = vcmp.eq.f32.partialorder %v1216, inf
    %v1247 = vsel %vm1246, %v1216, %v1245
    %vm1248 = vcmp.eq.f32.partialorder %v1216, 0.0
    %v1249 = vand.u32 %v1216, 2147483648
    %v1250 = vsel %vm1248, %v1249, %v1247
    %v1251 = vrsqrt.pop %v1217
    %v1252 = vmul.f32 %v1217, %v1251
    %vm1253 = vcmp.eq.f32.partialorder %v1217, inf
    %v1254 = vsel %vm1253, %v1217, %v1252
    %vm1255 = vcmp.eq.f32.partialorder %v1217, 0.0
    %v1256 = vand.u32 %v1217, 2147483648
    %v1257 = vsel %vm1255, %v1256, %v1254
    %v1258 = vrsqrt.pop %v1218
    %v1259 = vmul.f32 %v1218, %v1258
    %vm1260 = vcmp.eq.f32.partialorder %v1218, inf
    %v1261 = vsel %vm1260, %v1218, %v1259
    %vm1262 = vcmp.eq.f32.partialorder %v1218, 0.0
    %v1263 = vand.u32 %v1218, 2147483648
    %v1264 = vsel %vm1262, %v1263, %v1261
    %v1265 = vrsqrt.pop %v1219
    %v1266 = vmul.f32 %v1219, %v1265
    %vm1267 = vcmp.eq.f32.partialorder %v1219, inf
    %v1268 = vsel %vm1267, %v1219, %v1266
    %vm1269 = vcmp.eq.f32.partialorder %v1219, 0.0
    %v1270 = vand.u32 %v1219, 2147483648
    %v1271 = vsel %vm1269, %v1270, %v1268
    %v1272 = vrsqrt.pop %v1220
    %v1273 = vmul.f32 %v1220, %v1272
    %vm1274 = vcmp.eq.f32.partialorder %v1220, inf
    %v1275 = vsel %vm1274, %v1220, %v1273
    %vm1276 = vcmp.eq.f32.partialorder %v1220, 0.0
    %v1277 = vand.u32 %v1220, 2147483648
    %v1278 = vsel %vm1276, %v1277, %v1275
    %v1279 = vrsqrt.pop %v1221
    %v1280 = vmul.f32 %v1221, %v1279
    %vm1281 = vcmp.eq.f32.partialorder %v1221, inf
    %v1282 = vsel %vm1281, %v1221, %v1280
    %vm1283 = vcmp.eq.f32.partialorder %v1221, 0.0
    %v1284 = vand.u32 %v1221, 2147483648
    %v1285 = vsel %vm1283, %v1284, %v1282
    %v1286 = vrsqrt.pop %v1222
    %v1287 = vmul.f32 %v1222, %v1286
    %vm1288 = vcmp.eq.f32.partialorder %v1222, inf
    %v1289 = vsel %vm1288, %v1222, %v1287
    %vm1290 = vcmp.eq.f32.partialorder %v1222, 0.0
    %v1291 = vand.u32 %v1222, 2147483648
    %v1292 = vsel %vm1290, %v1291, %v1289
    %v1293 = vrsqrt.pop %v1223
    %v1294 = vmul.f32 %v1223, %v1293
    %vm1295 = vcmp.eq.f32.partialorder %v1223, inf
    %v1296 = vsel %vm1295, %v1223, %v1294
    %vm1297 = vcmp.eq.f32.partialorder %v1223, 0.0
    %v1298 = vand.u32 %v1223, 2147483648
    %v1299 = vsel %vm1297, %v1298, %v1296
    %v1300 = vrsqrt.pop %v1224
    %v1301 = vmul.f32 %v1224, %v1300
    %vm1302 = vcmp.eq.f32.partialorder %v1224, inf
    %v1303 = vsel %vm1302, %v1224, %v1301
    %vm1304 = vcmp.eq.f32.partialorder %v1224, 0.0
    %v1305 = vand.u32 %v1224, 2147483648
    %v1306 = vsel %vm1304, %v1305, %v1303
    %v1307 = vrsqrt.pop %v1225
    %v1308 = vmul.f32 %v1225, %v1307
    %vm1309 = vcmp.eq.f32.partialorder %v1225, inf
    %v1310 = vsel %vm1309, %v1225, %v1308
    %vm1311 = vcmp.eq.f32.partialorder %v1225, 0.0
    %v1312 = vand.u32 %v1225, 2147483648
    %v1313 = vsel %vm1311, %v1312, %v1310
    %v1314 = vrsqrt.pop %v1226
    %v1315 = vmul.f32 %v1226, %v1314
    %vm1316 = vcmp.eq.f32.partialorder %v1226, inf
    %v1317 = vsel %vm1316, %v1226, %v1315
    %vm1318 = vcmp.eq.f32.partialorder %v1226, 0.0
    %v1319 = vand.u32 %v1226, 2147483648
    %v1320 = vsel %vm1318, %v1319, %v1317
    %v1321 = vrsqrt.pop %v1227
    %v1322 = vmul.f32 %v1227, %v1321
    %vm1323 = vcmp.eq.f32.partialorder %v1227, inf
    %v1324 = vsel %vm1323, %v1227, %v1322
    %vm1325 = vcmp.eq.f32.partialorder %v1227, 0.0
    %v1326 = vand.u32 %v1227, 2147483648
    %v1327 = vsel %vm1325, %v1326, %v1324
    %v1328 = vrsqrt.pop %v1228
    %v1329 = vmul.f32 %v1228, %v1328
    %vm1330 = vcmp.eq.f32.partialorder %v1228, inf
    %v1331 = vsel %vm1330, %v1228, %v1329
    %vm1332 = vcmp.eq.f32.partialorder %v1228, 0.0
    %v1333 = vand.u32 %v1228, 2147483648
    %v1334 = vsel %vm1332, %v1333, %v1331
    %v1335 = vrsqrt.pop %v1229
    %v1336 = vmul.f32 %v1229, %v1335
    %vm1337 = vcmp.eq.f32.partialorder %v1229, inf
    %v1338 = vsel %vm1337, %v1229, %v1336
    %vm1339 = vcmp.eq.f32.partialorder %v1229, 0.0
    %v1340 = vand.u32 %v1229, 2147483648
    %v1341 = vsel %vm1339, %v1340, %v1338
    %v1342 = vmul.f32 %v1182, %v1236
    %v1343 = vmul.f32 %v1183, %v1243
    %v1344 = vmul.f32 %v1184, %v1250
    %v1345 = vmul.f32 %v1185, %v1257
    %v1346 = vmul.f32 %v1186, %v1264
    %v1347 = vmul.f32 %v1187, %v1271
    %v1348 = vmul.f32 %v1188, %v1278
    %v1349 = vmul.f32 %v1189, %v1285
    %v1350 = vmul.f32 %v1190, %v1292
    %v1351 = vmul.f32 %v1191, %v1299
    %v1352 = vmul.f32 %v1192, %v1306
    %v1353 = vmul.f32 %v1193, %v1313
    %v1354 = vmul.f32 %v1194, %v1320
    %v1355 = vmul.f32 %v1195, %v1327
    %v1356 = vmul.f32 %v1196, %v1334
    %v1357 = vmul.f32 %v1197, %v1341
    %v1358 = vsub.f32 %v1118, %v1342
    %v1359 = vsub.f32 %v1119, %v1343
    %v1360 = vsub.f32 %v1120, %v1344
    %v1361 = vsub.f32 %v1121, %v1345
    %v1362 = vsub.f32 %v1122, %v1346
    %v1363 = vsub.f32 %v1123, %v1347
    %v1364 = vsub.f32 %v1124, %v1348
    %v1365 = vsub.f32 %v1125, %v1349
    %v1366 = vsub.f32 %v1126, %v1350
    %v1367 = vsub.f32 %v1127, %v1351
    %v1368 = vsub.f32 %v1128, %v1352
    %v1369 = vsub.f32 %v1129, %v1353
    %v1370 = vsub.f32 %v1130, %v1354
    %v1371 = vsub.f32 %v1131, %v1355
    %v1372 = vsub.f32 %v1132, %v1356
    %v1373 = vsub.f32 %v1133, %v1357
    %v1374 = vadd.f32 %v1358, 5.0
    %v1375 = vadd.f32 %v1359, 5.0
    %v1376 = vadd.f32 %v1360, 5.0
    %v1377 = vadd.f32 %v1361, 5.0
    %v1378 = vadd.f32 %v1362, 5.0
    %v1379 = vadd.f32 %v1363, 5.0
    %v1380 = vadd.f32 %v1364, 5.0
    %v1381 = vadd.f32 %v1365, 5.0
    %v1382 = vadd.f32 %v1366, 5.0
    %v1383 = vadd.f32 %v1367, 5.0
    %v1384 = vadd.f32 %v1368, 5.0
    %v1385 = vadd.f32 %v1369, 5.0
    %v1386 = vadd.f32 %v1370, 5.0
    %v1387 = vadd.f32 %v1371, 5.0
    %v1388 = vadd.f32 %v1372, 5.0
    %v1389 = vadd.f32 %v1373, 5.0
    %v1390 = vmax.f32 %v1374, 0.0
    %v1391 = vmax.f32 %v1375, 0.0
    %v1392 = vmax.f32 %v1376, 0.0
    %v1393 = vmax.f32 %v1377, 0.0
    %v1394 = vmax.f32 %v1378, 0.0
    %v1395 = vmax.f32 %v1379, 0.0
    %v1396 = vmax.f32 %v1380, 0.0
    %v1397 = vmax.f32 %v1381, 0.0
    %v1398 = vmax.f32 %v1382, 0.0
    %v1399 = vmax.f32 %v1383, 0.0
    %v1400 = vmax.f32 %v1384, 0.0
    %v1401 = vmax.f32 %v1385, 0.0
    %v1402 = vmax.f32 %v1386, 0.0
    %v1403 = vmax.f32 %v1387, 0.0
    %v1404 = vmax.f32 %v1388, 0.0
    %v1405 = vmax.f32 %v1389, 0.0
    %v1406 = vstv %s416
    %v1407 = vadd.s32 %v1406, %v381
    %v1408 = vadd.s32 %v1406, %v382
    %v1409 = vadd.s32 %v1406, %v383
    %v1410 = vadd.s32 %v1406, %v384
    %v1411 = vadd.s32 %v1406, %v385
    %v1412 = vadd.s32 %v1406, %v386
    %v1413 = vadd.s32 %v1406, %v387
    %v1414 = vadd.s32 %v1406, %v388
    %v1415 = vadd.s32 %v1406, %v389
    %v1416 = vadd.s32 %v1406, %v390
    %v1417 = vadd.s32 %v1406, %v391
    %v1418 = vadd.s32 %v1406, %v392
    %v1419 = vadd.s32 %v1406, %v393
    %v1420 = vadd.s32 %v1406, %v394
    %v1421 = vadd.s32 %v1406, %v395
    %v1422 = vadd.s32 %v1406, %v396
    %vm1423 = vcmp.lt.s32.totalorder %v1407, 8
    %vm1424 = vcmp.lt.s32.totalorder %v1408, 8
    %vm1425 = vcmp.lt.s32.totalorder %v1409, 8
    %vm1426 = vcmp.lt.s32.totalorder %v1410, 8
    %vm1427 = vcmp.lt.s32.totalorder %v1411, 8
    %vm1428 = vcmp.lt.s32.totalorder %v1412, 8
    %vm1429 = vcmp.lt.s32.totalorder %v1413, 8
    %vm1430 = vcmp.lt.s32.totalorder %v1414, 8
    %vm1431 = vcmp.lt.s32.totalorder %v1415, 8
    %vm1432 = vcmp.lt.s32.totalorder %v1416, 8
    %vm1433 = vcmp.lt.s32.totalorder %v1417, 8
    %vm1434 = vcmp.lt.s32.totalorder %v1418, 8
    %vm1435 = vcmp.lt.s32.totalorder %v1419, 8
    %vm1436 = vcmp.lt.s32.totalorder %v1420, 8
    %vm1437 = vcmp.lt.s32.totalorder %v1421, 8
    %vm1438 = vcmp.lt.s32.totalorder %v1422, 8
    %v1439 = vsel %vm1423, %v1390, 0.0
    %v1440 = vsel %vm1424, %v1391, 0.0
    %v1441 = vsel %vm1425, %v1392, 0.0
    %v1442 = vsel %vm1426, %v1393, 0.0
    %v1443 = vsel %vm1427, %v1394, 0.0
    %v1444 = vsel %vm1428, %v1395, 0.0
    %v1445 = vsel %vm1429, %v1396, 0.0
    %v1446 = vsel %vm1430, %v1397, 0.0
    %v1447 = vsel %vm1431, %v1398, 0.0
    %v1448 = vsel %vm1432, %v1399, 0.0
    %v1449 = vsel %vm1433, %v1400, 0.0
    %v1450 = vsel %vm1434, %v1401, 0.0
    %v1451 = vsel %vm1435, %v1402, 0.0
    %v1452 = vsel %vm1436, %v1403, 0.0
    %v1453 = vsel %vm1437, %v1404, 0.0
    %v1454 = vsel %vm1438, %v1405, 0.0
    %1455 = vst.msk [vmem:[%s7] sm:$0xff] %vm547, %v1439
    %1456 = vst.msk [vmem:[%s7 + $0x8] sm:$0xff] %vm547, %v1440
    %1457 = vst.msk [vmem:[%s7 + $0x10] sm:$0xff] %vm547, %v1441
    %1458 = vst.msk [vmem:[%s7 + $0x18] sm:$0xff] %vm547, %v1442
    %1459 = vst.msk [vmem:[%s7 + $0x20] sm:$0xff] %vm547, %v1443
    %1460 = vst.msk [vmem:[%s7 + $0x28] sm:$0xff] %vm547, %v1444
    %1461 = vst.msk [vmem:[%s7 + $0x30] sm:$0xff] %vm547, %v1445
    %1462 = vst.msk [vmem:[%s7 + $0x38] sm:$0xff] %vm547, %v1446
    %1463 = vst.msk [vmem:[%s7 + $0x40] sm:$0xff] %vm547, %v1447
    %1464 = vst.msk [vmem:[%s7 + $0x48] sm:$0xff] %vm547, %v1448
    %1465 = vst.msk [vmem:[%s7 + $0x50] sm:$0xff] %vm547, %v1449
    %1466 = vst.msk [vmem:[%s7 + $0x58] sm:$0xff] %vm547, %v1450
    %1467 = vst.msk [vmem:[%s7 + $0x60] sm:$0xff] %vm547, %v1451
    %1468 = vst.msk [vmem:[%s7 + $0x68] sm:$0xff] %vm547, %v1452
    %1469 = vst.msk [vmem:[%s7 + $0x70] sm:$0xff] %vm547, %v1453
    %1470 = vst.msk [vmem:[%s7 + $0x78] sm:$0xff] %vm547, %v1454
  $region37: #{batch_hard_triplet_loss.1} parent=0 // pred_fallthru
    _
  // Predicated region
  $region38: #{batch_hard_triplet_loss.1} parent=0 // pred_check
    _
  $region39: #{batch_hard_triplet_loss.1} parent=0 // pred_check_branch
    %1472 = sbr.rel (0) target = $region41
  $region40: #{batch_hard_triplet_loss.1} parent=0 // pred_region
    _
  $region41: #{batch_hard_triplet_loss.1} parent=0 // pred_fallthru
    _
  // Predicated region
  $region42: #{batch_hard_triplet_loss.1} parent=0 // pred_check
    _
  $region43: #{batch_hard_triplet_loss.1} parent=0 // pred_check_branch
    %1474 = sbr.rel (0) target = $region45
  $region44: #{batch_hard_triplet_loss.1} parent=0 // pred_region
    _
  $region45: #{batch_hard_triplet_loss.1} parent=0 // pred_fallthru
    _

</llo_original>
